<compile_context>
chip_gen: v7x
topology: tpu7x:2x2x1
jax: 0.10.0
libtpu: 0.0.40
codegen_flags: <defaults>
</compile_context>

<pallas_src>
import jax
import jax.numpy as jnp
from jax import lax
from jax.experimental import pallas as pl
from jax.experimental.pallas import tpu as pltpu

B = 2                 # batch (small)
H = W = 28            # input spatial (fixed by the module: view(B,1,28,28))
KH = KW = 6           # conv kernel size
OH = OW = 23          # conv output spatial (28 - 6 + 1)
C_OUT = 30            # conv out channels
K = KH * KW           # 36  (in_channels = 1)
P = OH * OW           # 529
F = C_OUT * P         # 15870
N_CLASSES = 10


# ----------------------------- Pallas kernel --------------------------------

def fused_kernel(p_ref, w_ref, o_ref):
    # p_ref : (B, 36, 529)   im2col patches (f32)
    # w_ref : (10, 36, 529)  conv-folded linear weight Weff (f32)
    # o_ref : (B, 10)        log-softmax output
    bsz = p_ref.shape[0]
    n_cls = w_ref.shape[0]

    # class index along lanes, used to scatter each scalar logit into its slot
    lane_ids = lax.broadcasted_iota(jnp.int32, (1, n_cls), 1)      # (1, 10)

    for b in range(bsz):
        pb = p_ref[b]                                              # (36, 529)
        row = jnp.zeros((1, n_cls), jnp.float32)
        for n in range(n_cls):
            # logits[b, n] = sum_{k,p} patches[b,k,p] * Weff[n,k,p]
            prod = pb * w_ref[n]                                   # VPU (36,529)
            t = jnp.sum(prod, axis=1, keepdims=True)               # XLU lane  -> (36, 1)
            s = jnp.sum(t, axis=0, keepdims=True)                  # sublane   -> (1, 1)
            row = row + jnp.where(lane_ids == n, s, 0.0)           # place at lane n

        # numerically-stable log-softmax over the 10 classes
        m = jnp.max(row, axis=-1, keepdims=True)
        z = row - m
        lse = jnp.log(jnp.sum(jnp.exp(z), axis=-1, keepdims=True))
        o_ref[pl.ds(b, 1), :] = z - lse


# ------------------------------ JAX glue -------------------------------------

def im2col(img, bsz):
    # img: (B, 28, 28) -> (B, 36, 529) using 36 static slices (no XLA gather).
    slabs = []
    for kh in range(KH):
        for kw in range(KW):
            slabs.append(lax.slice(img, (0, kh, kw), (bsz, kh + OH, kw + OW)))
    patches = jnp.stack(slabs, axis=1)                 # (B, 36, 23, 23)
    return patches.reshape(bsz, K, P)                  # (B, 36, 529)


@jax.jit
def conv2d_then_linear(x, w_conv, w_lin):
    # x: (B, 1, 28, 28); w_conv: (30, 1, 6, 6); w_lin: (10, 15870)
    bsz = x.shape[0]
    x = x.reshape(bsz, 1, H, W).astype(jnp.float32)    # torch .view(B,1,28,28)
    patches = im2col(x[:, 0], bsz)                     # (B, 36, 529)

    # Fold conv into the linear weight (exact; tiny weights-only matmul).
    wc = w_conv.reshape(C_OUT, K).astype(jnp.float32)              # (30, 36)
    wl = w_lin.reshape(N_CLASSES, C_OUT, P).astype(jnp.float32)    # (10, 30, 529)
    weff = jnp.einsum("ck,ncp->nkp", wc, wl)                       # (10, 36, 529)

    out = pl.pallas_call(
        fused_kernel,
        out_shape=jax.ShapeDtypeStruct((bsz, N_CLASSES), jnp.float32),
        grid_spec=pltpu.PrefetchScalarGridSpec(
            num_scalar_prefetch=0,
            grid=(1,),   # single step: both batch elements handled in one shot
            in_specs=[
                pl.BlockSpec((bsz, K, P), lambda i: (0, 0, 0)),
                pl.BlockSpec((N_CLASSES, K, P), lambda i: (0, 0, 0)),
            ],
            out_specs=pl.BlockSpec((bsz, N_CLASSES), lambda i: (0, 0)),
        ),
        compiler_params=pltpu.CompilerParams(
            dimension_semantics=("arbitrary",)),
    )(patches, weff)
    return out                                          # (B, 10)


# ------------------------------- main ----------------------------------------

if __name__ == "__main__":
    key = jax.random.PRNGKey(0)
    k_x, k_wc, k_wl = jax.random.split(key, 3)

    # deterministic synthetic parameters (module only defines shapes, no bias)
    x = jax.random.normal(k_x, (B, 1, H, W), jnp.float32)
    w_conv = jax.random.normal(k_wc, (C_OUT, 1, KH, KW), jnp.float32) * (1.0 / 6.0)
    w_lin = jax.random.normal(k_wl, (N_CLASSES, F), jnp.float32) * 0.01

    out = jax.block_until_ready(conv2d_then_linear(x, w_conv, w_lin))

    # pure-JAX reference to validate exact forward semantics
    ref_conv = lax.conv_general_dilated(
        x, w_conv, window_strides=(1, 1), padding="VALID",
        dimension_numbers=("NCHW", "OIHW", "NCHW"))
    ref_logits = ref_conv.reshape(B, F) @ w_lin.T
    ref = jax.nn.log_softmax(ref_logits, axis=1)

    assert out.shape == (B, N_CLASSES)
    assert jnp.allclose(out, ref, atol=1e-3, rtol=1e-3), (
        f"max abs err = {jnp.max(jnp.abs(out - ref))}")
    print("KERNEL_OK")
</pallas_src>

<mosaic_0001>
module attributes {stable_mosaic.version = 11 : i64} {
  func.func @fused_kernel(%arg0: i32, %arg1: memref<2x36x529xf32, #tpu.memory_space<vmem>>, %arg2: memref<10x36x529xf32, #tpu.memory_space<vmem>>, %arg3: memref<2x10xf32, #tpu.memory_space<vmem>>) attributes {dimension_semantics = [#tpu.dimension_semantics<arbitrary>], iteration_bounds = array<i64: 1>, scalar_prefetch = 0 : i64, scratch_operands = 0 : i64, tpu.core_type = #tpu.core_type<tc>, window_params = [{pipeline_mode = #tpu.pipeline_mode<synchronous>, transform_indices = @transform_0, window_bounds = array<i64: 2, 36, 529>}, {pipeline_mode = #tpu.pipeline_mode<synchronous>, transform_indices = @transform_1, window_bounds = array<i64: 10, 36, 529>}, {pipeline_mode = #tpu.pipeline_mode<synchronous>, transform_indices = @transform_2, window_bounds = array<i64: 2, 10>}]} {
    %0 = tpu.iota {dimensions = array<i32: 1>} : vector<1x10xi32>
    %c0 = arith.constant 0 : index
    %c0_0 = arith.constant 0 : index
    %c0_1 = arith.constant 0 : index
    %1 = vector.load %arg1[%c0, %c0_0, %c0_1] : memref<2x36x529xf32, #tpu.memory_space<vmem>>, vector<1x36x529xf32>
    %2 = vector.shape_cast %1 : vector<1x36x529xf32> to vector<36x529xf32>
    %cst = arith.constant 0.000000e+00 : f32
    %3 = vector.broadcast %cst : f32 to vector<1x10xf32>
    %c0_2 = arith.constant 0 : index
    %c0_3 = arith.constant 0 : index
    %c0_4 = arith.constant 0 : index
    %4 = vector.load %arg2[%c0_2, %c0_3, %c0_4] : memref<10x36x529xf32, #tpu.memory_space<vmem>>, vector<1x36x529xf32>
    %5 = vector.shape_cast %4 : vector<1x36x529xf32> to vector<36x529xf32>
    %6 = arith.mulf %2, %5 : vector<36x529xf32>
    %cst_5 = arith.constant dense<0.000000e+00> : vector<36xf32>
    %7 = vector.multi_reduction <add>, %6, %cst_5 [1] : vector<36x529xf32> to vector<36xf32>
    %8 = vector.shape_cast %7 : vector<36xf32> to vector<36x1xf32>
    %cst_6 = arith.constant dense<0.000000e+00> : vector<1xf32>
    %9 = vector.multi_reduction <add>, %8, %cst_6 [0] : vector<36x1xf32> to vector<1xf32>
    %10 = vector.shape_cast %9 : vector<1xf32> to vector<1x1xf32>
    %c0_i32 = arith.constant 0 : i32
    %11 = vector.broadcast %c0_i32 : i32 to vector<1x10xi32>
    %12 = arith.cmpi eq, %0, %11 : vector<1x10xi32>
    %cst_7 = arith.constant 0.000000e+00 : f32
    %13 = vector.shape_cast %10 : vector<1x1xf32> to vector<1x1xf32>
    %14 = vector.broadcast %13 : vector<1x1xf32> to vector<1x10xf32>
    %15 = vector.broadcast %cst_7 : f32 to vector<1x10xf32>
    %16 = arith.select %12, %14, %15 : vector<1x10xi1>, vector<1x10xf32>
    %17 = arith.addf %3, %16 : vector<1x10xf32>
    %c1 = arith.constant 1 : index
    %c0_8 = arith.constant 0 : index
    %c0_9 = arith.constant 0 : index
    %18 = vector.load %arg2[%c1, %c0_8, %c0_9] : memref<10x36x529xf32, #tpu.memory_space<vmem>>, vector<1x36x529xf32>
    %19 = vector.shape_cast %18 : vector<1x36x529xf32> to vector<36x529xf32>
    %20 = arith.mulf %2, %19 : vector<36x529xf32>
    %cst_10 = arith.constant dense<0.000000e+00> : vector<36xf32>
    %21 = vector.multi_reduction <add>, %20, %cst_10 [1] : vector<36x529xf32> to vector<36xf32>
    %22 = vector.shape_cast %21 : vector<36xf32> to vector<36x1xf32>
    %cst_11 = arith.constant dense<0.000000e+00> : vector<1xf32>
    %23 = vector.multi_reduction <add>, %22, %cst_11 [0] : vector<36x1xf32> to vector<1xf32>
    %24 = vector.shape_cast %23 : vector<1xf32> to vector<1x1xf32>
    %c1_i32 = arith.constant 1 : i32
    %25 = vector.broadcast %c1_i32 : i32 to vector<1x10xi32>
    %26 = arith.cmpi eq, %0, %25 : vector<1x10xi32>
    %cst_12 = arith.constant 0.000000e+00 : f32
    %27 = vector.shape_cast %24 : vector<1x1xf32> to vector<1x1xf32>
    %28 = vector.broadcast %27 : vector<1x1xf32> to vector<1x10xf32>
    %29 = vector.broadcast %cst_12 : f32 to vector<1x10xf32>
    %30 = arith.select %26, %28, %29 : vector<1x10xi1>, vector<1x10xf32>
    %31 = arith.addf %17, %30 : vector<1x10xf32>
    %c2 = arith.constant 2 : index
    %c0_13 = arith.constant 0 : index
    %c0_14 = arith.constant 0 : index
    %32 = vector.load %arg2[%c2, %c0_13, %c0_14] : memref<10x36x529xf32, #tpu.memory_space<vmem>>, vector<1x36x529xf32>
    %33 = vector.shape_cast %32 : vector<1x36x529xf32> to vector<36x529xf32>
    %34 = arith.mulf %2, %33 : vector<36x529xf32>
    %cst_15 = arith.constant dense<0.000000e+00> : vector<36xf32>
    %35 = vector.multi_reduction <add>, %34, %cst_15 [1] : vector<36x529xf32> to vector<36xf32>
    %36 = vector.shape_cast %35 : vector<36xf32> to vector<36x1xf32>
    %cst_16 = arith.constant dense<0.000000e+00> : vector<1xf32>
    %37 = vector.multi_reduction <add>, %36, %cst_16 [0] : vector<36x1xf32> to vector<1xf32>
    %38 = vector.shape_cast %37 : vector<1xf32> to vector<1x1xf32>
    %c2_i32 = arith.constant 2 : i32
    %39 = vector.broadcast %c2_i32 : i32 to vector<1x10xi32>
    %40 = arith.cmpi eq, %0, %39 : vector<1x10xi32>
    %cst_17 = arith.constant 0.000000e+00 : f32
    %41 = vector.shape_cast %38 : vector<1x1xf32> to vector<1x1xf32>
    %42 = vector.broadcast %41 : vector<1x1xf32> to vector<1x10xf32>
    %43 = vector.broadcast %cst_17 : f32 to vector<1x10xf32>
    %44 = arith.select %40, %42, %43 : vector<1x10xi1>, vector<1x10xf32>
    %45 = arith.addf %31, %44 : vector<1x10xf32>
    %c3 = arith.constant 3 : index
    %c0_18 = arith.constant 0 : index
    %c0_19 = arith.constant 0 : index
    %46 = vector.load %arg2[%c3, %c0_18, %c0_19] : memref<10x36x529xf32, #tpu.memory_space<vmem>>, vector<1x36x529xf32>
    %47 = vector.shape_cast %46 : vector<1x36x529xf32> to vector<36x529xf32>
    %48 = arith.mulf %2, %47 : vector<36x529xf32>
    %cst_20 = arith.constant dense<0.000000e+00> : vector<36xf32>
    %49 = vector.multi_reduction <add>, %48, %cst_20 [1] : vector<36x529xf32> to vector<36xf32>
    %50 = vector.shape_cast %49 : vector<36xf32> to vector<36x1xf32>
    %cst_21 = arith.constant dense<0.000000e+00> : vector<1xf32>
    %51 = vector.multi_reduction <add>, %50, %cst_21 [0] : vector<36x1xf32> to vector<1xf32>
    %52 = vector.shape_cast %51 : vector<1xf32> to vector<1x1xf32>
    %c3_i32 = arith.constant 3 : i32
    %53 = vector.broadcast %c3_i32 : i32 to vector<1x10xi32>
    %54 = arith.cmpi eq, %0, %53 : vector<1x10xi32>
    %cst_22 = arith.constant 0.000000e+00 : f32
    %55 = vector.shape_cast %52 : vector<1x1xf32> to vector<1x1xf32>
    %56 = vector.broadcast %55 : vector<1x1xf32> to vector<1x10xf32>
    %57 = vector.broadcast %cst_22 : f32 to vector<1x10xf32>
    %58 = arith.select %54, %56, %57 : vector<1x10xi1>, vector<1x10xf32>
    %59 = arith.addf %45, %58 : vector<1x10xf32>
    %c4 = arith.constant 4 : index
    %c0_23 = arith.constant 0 : index
    %c0_24 = arith.constant 0 : index
    %60 = vector.load %arg2[%c4, %c0_23, %c0_24] : memref<10x36x529xf32, #tpu.memory_space<vmem>>, vector<1x36x529xf32>
    %61 = vector.shape_cast %60 : vector<1x36x529xf32> to vector<36x529xf32>
    %62 = arith.mulf %2, %61 : vector<36x529xf32>
    %cst_25 = arith.constant dense<0.000000e+00> : vector<36xf32>
    %63 = vector.multi_reduction <add>, %62, %cst_25 [1] : vector<36x529xf32> to vector<36xf32>
    %64 = vector.shape_cast %63 : vector<36xf32> to vector<36x1xf32>
    %cst_26 = arith.constant dense<0.000000e+00> : vector<1xf32>
    %65 = vector.multi_reduction <add>, %64, %cst_26 [0] : vector<36x1xf32> to vector<1xf32>
    %66 = vector.shape_cast %65 : vector<1xf32> to vector<1x1xf32>
    %c4_i32 = arith.constant 4 : i32
    %67 = vector.broadcast %c4_i32 : i32 to vector<1x10xi32>
    %68 = arith.cmpi eq, %0, %67 : vector<1x10xi32>
    %cst_27 = arith.constant 0.000000e+00 : f32
    %69 = vector.shape_cast %66 : vector<1x1xf32> to vector<1x1xf32>
    %70 = vector.broadcast %69 : vector<1x1xf32> to vector<1x10xf32>
    %71 = vector.broadcast %cst_27 : f32 to vector<1x10xf32>
    %72 = arith.select %68, %70, %71 : vector<1x10xi1>, vector<1x10xf32>
    %73 = arith.addf %59, %72 : vector<1x10xf32>
    %c5 = arith.constant 5 : index
    %c0_28 = arith.constant 0 : index
    %c0_29 = arith.constant 0 : index
    %74 = vector.load %arg2[%c5, %c0_28, %c0_29] : memref<10x36x529xf32, #tpu.memory_space<vmem>>, vector<1x36x529xf32>
    %75 = vector.shape_cast %74 : vector<1x36x529xf32> to vector<36x529xf32>
    %76 = arith.mulf %2, %75 : vector<36x529xf32>
    %cst_30 = arith.constant dense<0.000000e+00> : vector<36xf32>
    %77 = vector.multi_reduction <add>, %76, %cst_30 [1] : vector<36x529xf32> to vector<36xf32>
    %78 = vector.shape_cast %77 : vector<36xf32> to vector<36x1xf32>
    %cst_31 = arith.constant dense<0.000000e+00> : vector<1xf32>
    %79 = vector.multi_reduction <add>, %78, %cst_31 [0] : vector<36x1xf32> to vector<1xf32>
    %80 = vector.shape_cast %79 : vector<1xf32> to vector<1x1xf32>
    %c5_i32 = arith.constant 5 : i32
    %81 = vector.broadcast %c5_i32 : i32 to vector<1x10xi32>
    %82 = arith.cmpi eq, %0, %81 : vector<1x10xi32>
    %cst_32 = arith.constant 0.000000e+00 : f32
    %83 = vector.shape_cast %80 : vector<1x1xf32> to vector<1x1xf32>
    %84 = vector.broadcast %83 : vector<1x1xf32> to vector<1x10xf32>
    %85 = vector.broadcast %cst_32 : f32 to vector<1x10xf32>
    %86 = arith.select %82, %84, %85 : vector<1x10xi1>, vector<1x10xf32>
    %87 = arith.addf %73, %86 : vector<1x10xf32>
    %c6 = arith.constant 6 : index
    %c0_33 = arith.constant 0 : index
    %c0_34 = arith.constant 0 : index
    %88 = vector.load %arg2[%c6, %c0_33, %c0_34] : memref<10x36x529xf32, #tpu.memory_space<vmem>>, vector<1x36x529xf32>
    %89 = vector.shape_cast %88 : vector<1x36x529xf32> to vector<36x529xf32>
    %90 = arith.mulf %2, %89 : vector<36x529xf32>
    %cst_35 = arith.constant dense<0.000000e+00> : vector<36xf32>
    %91 = vector.multi_reduction <add>, %90, %cst_35 [1] : vector<36x529xf32> to vector<36xf32>
    %92 = vector.shape_cast %91 : vector<36xf32> to vector<36x1xf32>
    %cst_36 = arith.constant dense<0.000000e+00> : vector<1xf32>
    %93 = vector.multi_reduction <add>, %92, %cst_36 [0] : vector<36x1xf32> to vector<1xf32>
    %94 = vector.shape_cast %93 : vector<1xf32> to vector<1x1xf32>
    %c6_i32 = arith.constant 6 : i32
    %95 = vector.broadcast %c6_i32 : i32 to vector<1x10xi32>
    %96 = arith.cmpi eq, %0, %95 : vector<1x10xi32>
    %cst_37 = arith.constant 0.000000e+00 : f32
    %97 = vector.shape_cast %94 : vector<1x1xf32> to vector<1x1xf32>
    %98 = vector.broadcast %97 : vector<1x1xf32> to vector<1x10xf32>
    %99 = vector.broadcast %cst_37 : f32 to vector<1x10xf32>
    %100 = arith.select %96, %98, %99 : vector<1x10xi1>, vector<1x10xf32>
    %101 = arith.addf %87, %100 : vector<1x10xf32>
    %c7 = arith.constant 7 : index
    %c0_38 = arith.constant 0 : index
    %c0_39 = arith.constant 0 : index
    %102 = vector.load %arg2[%c7, %c0_38, %c0_39] : memref<10x36x529xf32, #tpu.memory_space<vmem>>, vector<1x36x529xf32>
    %103 = vector.shape_cast %102 : vector<1x36x529xf32> to vector<36x529xf32>
    %104 = arith.mulf %2, %103 : vector<36x529xf32>
    %cst_40 = arith.constant dense<0.000000e+00> : vector<36xf32>
    %105 = vector.multi_reduction <add>, %104, %cst_40 [1] : vector<36x529xf32> to vector<36xf32>
    %106 = vector.shape_cast %105 : vector<36xf32> to vector<36x1xf32>
    %cst_41 = arith.constant dense<0.000000e+00> : vector<1xf32>
    %107 = vector.multi_reduction <add>, %106, %cst_41 [0] : vector<36x1xf32> to vector<1xf32>
    %108 = vector.shape_cast %107 : vector<1xf32> to vector<1x1xf32>
    %c7_i32 = arith.constant 7 : i32
    %109 = vector.broadcast %c7_i32 : i32 to vector<1x10xi32>
    %110 = arith.cmpi eq, %0, %109 : vector<1x10xi32>
    %cst_42 = arith.constant 0.000000e+00 : f32
    %111 = vector.shape_cast %108 : vector<1x1xf32> to vector<1x1xf32>
    %112 = vector.broadcast %111 : vector<1x1xf32> to vector<1x10xf32>
    %113 = vector.broadcast %cst_42 : f32 to vector<1x10xf32>
    %114 = arith.select %110, %112, %113 : vector<1x10xi1>, vector<1x10xf32>
    %115 = arith.addf %101, %114 : vector<1x10xf32>
    %c8 = arith.constant 8 : index
    %c0_43 = arith.constant 0 : index
    %c0_44 = arith.constant 0 : index
    %116 = vector.load %arg2[%c8, %c0_43, %c0_44] : memref<10x36x529xf32, #tpu.memory_space<vmem>>, vector<1x36x529xf32>
    %117 = vector.shape_cast %116 : vector<1x36x529xf32> to vector<36x529xf32>
    %118 = arith.mulf %2, %117 : vector<36x529xf32>
    %cst_45 = arith.constant dense<0.000000e+00> : vector<36xf32>
    %119 = vector.multi_reduction <add>, %118, %cst_45 [1] : vector<36x529xf32> to vector<36xf32>
    %120 = vector.shape_cast %119 : vector<36xf32> to vector<36x1xf32>
    %cst_46 = arith.constant dense<0.000000e+00> : vector<1xf32>
    %121 = vector.multi_reduction <add>, %120, %cst_46 [0] : vector<36x1xf32> to vector<1xf32>
    %122 = vector.shape_cast %121 : vector<1xf32> to vector<1x1xf32>
    %c8_i32 = arith.constant 8 : i32
    %123 = vector.broadcast %c8_i32 : i32 to vector<1x10xi32>
    %124 = arith.cmpi eq, %0, %123 : vector<1x10xi32>
    %cst_47 = arith.constant 0.000000e+00 : f32
    %125 = vector.shape_cast %122 : vector<1x1xf32> to vector<1x1xf32>
    %126 = vector.broadcast %125 : vector<1x1xf32> to vector<1x10xf32>
    %127 = vector.broadcast %cst_47 : f32 to vector<1x10xf32>
    %128 = arith.select %124, %126, %127 : vector<1x10xi1>, vector<1x10xf32>
    %129 = arith.addf %115, %128 : vector<1x10xf32>
    %c9 = arith.constant 9 : index
    %c0_48 = arith.constant 0 : index
    %c0_49 = arith.constant 0 : index
    %130 = vector.load %arg2[%c9, %c0_48, %c0_49] : memref<10x36x529xf32, #tpu.memory_space<vmem>>, vector<1x36x529xf32>
    %131 = vector.shape_cast %130 : vector<1x36x529xf32> to vector<36x529xf32>
    %132 = arith.mulf %2, %131 : vector<36x529xf32>
    %cst_50 = arith.constant dense<0.000000e+00> : vector<36xf32>
    %133 = vector.multi_reduction <add>, %132, %cst_50 [1] : vector<36x529xf32> to vector<36xf32>
    %134 = vector.shape_cast %133 : vector<36xf32> to vector<36x1xf32>
    %cst_51 = arith.constant dense<0.000000e+00> : vector<1xf32>
    %135 = vector.multi_reduction <add>, %134, %cst_51 [0] : vector<36x1xf32> to vector<1xf32>
    %136 = vector.shape_cast %135 : vector<1xf32> to vector<1x1xf32>
    %c9_i32 = arith.constant 9 : i32
    %137 = vector.broadcast %c9_i32 : i32 to vector<1x10xi32>
    %138 = arith.cmpi eq, %0, %137 : vector<1x10xi32>
    %cst_52 = arith.constant 0.000000e+00 : f32
    %139 = vector.shape_cast %136 : vector<1x1xf32> to vector<1x1xf32>
    %140 = vector.broadcast %139 : vector<1x1xf32> to vector<1x10xf32>
    %141 = vector.broadcast %cst_52 : f32 to vector<1x10xf32>
    %142 = arith.select %138, %140, %141 : vector<1x10xi1>, vector<1x10xf32>
    %143 = arith.addf %129, %142 : vector<1x10xf32>
    %cst_53 = arith.constant dense<0xFF800000> : vector<1xf32>
    %144 = vector.multi_reduction <maximumf>, %143, %cst_53 [1] : vector<1x10xf32> to vector<1xf32>
    %145 = vector.shape_cast %144 : vector<1xf32> to vector<1x1xf32>
    %146 = vector.broadcast %145 : vector<1x1xf32> to vector<1x10xf32>
    %147 = arith.subf %143, %146 : vector<1x10xf32>
    %148 = math.exp %147 : vector<1x10xf32>
    %cst_54 = arith.constant dense<0.000000e+00> : vector<1xf32>
    %149 = vector.multi_reduction <add>, %148, %cst_54 [1] : vector<1x10xf32> to vector<1xf32>
    %150 = vector.shape_cast %149 : vector<1xf32> to vector<1x1xf32>
    %151 = math.log %150 : vector<1x1xf32>
    %152 = vector.broadcast %151 : vector<1x1xf32> to vector<1x10xf32>
    %153 = arith.subf %147, %152 : vector<1x10xf32>
    %c0_55 = arith.constant 0 : index
    %c0_56 = arith.constant 0 : index
    %154 = vector.load %arg3[%c0_55, %c0_56] : memref<2x10xf32, #tpu.memory_space<vmem>>, vector<1x10xf32>
    tpu.vector_store %arg3[%c0_55, %c0_56], %153 {strides = array<i32>} : memref<2x10xf32, #tpu.memory_space<vmem>>, vector<1x10xf32>,
    %c1_57 = arith.constant 1 : index
    %c0_58 = arith.constant 0 : index
    %c0_59 = arith.constant 0 : index
    %155 = vector.load %arg1[%c1_57, %c0_58, %c0_59] : memref<2x36x529xf32, #tpu.memory_space<vmem>>, vector<1x36x529xf32>
    %156 = vector.shape_cast %155 : vector<1x36x529xf32> to vector<36x529xf32>
    %cst_60 = arith.constant 0.000000e+00 : f32
    %157 = vector.broadcast %cst_60 : f32 to vector<1x10xf32>
    %c0_61 = arith.constant 0 : index
    %c0_62 = arith.constant 0 : index
    %c0_63 = arith.constant 0 : index
    %158 = vector.load %arg2[%c0_61, %c0_62, %c0_63] : memref<10x36x529xf32, #tpu.memory_space<vmem>>, vector<1x36x529xf32>
    %159 = vector.shape_cast %158 : vector<1x36x529xf32> to vector<36x529xf32>
    %160 = arith.mulf %156, %159 : vector<36x529xf32>
    %cst_64 = arith.constant dense<0.000000e+00> : vector<36xf32>
    %161 = vector.multi_reduction <add>, %160, %cst_64 [1] : vector<36x529xf32> to vector<36xf32>
    %162 = vector.shape_cast %161 : vector<36xf32> to vector<36x1xf32>
    %cst_65 = arith.constant dense<0.000000e+00> : vector<1xf32>
    %163 = vector.multi_reduction <add>, %162, %cst_65 [0] : vector<36x1xf32> to vector<1xf32>
    %164 = vector.shape_cast %163 : vector<1xf32> to vector<1x1xf32>
    %c0_i32_66 = arith.constant 0 : i32
    %165 = vector.broadcast %c0_i32_66 : i32 to vector<1x10xi32>
    %166 = arith.cmpi eq, %0, %165 : vector<1x10xi32>
    %cst_67 = arith.constant 0.000000e+00 : f32
    %167 = vector.shape_cast %164 : vector<1x1xf32> to vector<1x1xf32>
    %168 = vector.broadcast %167 : vector<1x1xf32> to vector<1x10xf32>
    %169 = vector.broadcast %cst_67 : f32 to vector<1x10xf32>
    %170 = arith.select %166, %168, %169 : vector<1x10xi1>, vector<1x10xf32>
    %171 = arith.addf %157, %170 : vector<1x10xf32>
    %c1_68 = arith.constant 1 : index
    %c0_69 = arith.constant 0 : index
    %c0_70 = arith.constant 0 : index
    %172 = vector.load %arg2[%c1_68, %c0_69, %c0_70] : memref<10x36x529xf32, #tpu.memory_space<vmem>>, vector<1x36x529xf32>
    %173 = vector.shape_cast %172 : vector<1x36x529xf32> to vector<36x529xf32>
    %174 = arith.mulf %156, %173 : vector<36x529xf32>
    %cst_71 = arith.constant dense<0.000000e+00> : vector<36xf32>
    %175 = vector.multi_reduction <add>, %174, %cst_71 [1] : vector<36x529xf32> to vector<36xf32>
    %176 = vector.shape_cast %175 : vector<36xf32> to vector<36x1xf32>
    %cst_72 = arith.constant dense<0.000000e+00> : vector<1xf32>
    %177 = vector.multi_reduction <add>, %176, %cst_72 [0] : vector<36x1xf32> to vector<1xf32>
    %178 = vector.shape_cast %177 : vector<1xf32> to vector<1x1xf32>
    %c1_i32_73 = arith.constant 1 : i32
    %179 = vector.broadcast %c1_i32_73 : i32 to vector<1x10xi32>
    %180 = arith.cmpi eq, %0, %179 : vector<1x10xi32>
    %cst_74 = arith.constant 0.000000e+00 : f32
    %181 = vector.shape_cast %178 : vector<1x1xf32> to vector<1x1xf32>
    %182 = vector.broadcast %181 : vector<1x1xf32> to vector<1x10xf32>
    %183 = vector.broadcast %cst_74 : f32 to vector<1x10xf32>
    %184 = arith.select %180, %182, %183 : vector<1x10xi1>, vector<1x10xf32>
    %185 = arith.addf %171, %184 : vector<1x10xf32>
    %c2_75 = arith.constant 2 : index
    %c0_76 = arith.constant 0 : index
    %c0_77 = arith.constant 0 : index
    %186 = vector.load %arg2[%c2_75, %c0_76, %c0_77] : memref<10x36x529xf32, #tpu.memory_space<vmem>>, vector<1x36x529xf32>
    %187 = vector.shape_cast %186 : vector<1x36x529xf32> to vector<36x529xf32>
    %188 = arith.mulf %156, %187 : vector<36x529xf32>
    %cst_78 = arith.constant dense<0.000000e+00> : vector<36xf32>
    %189 = vector.multi_reduction <add>, %188, %cst_78 [1] : vector<36x529xf32> to vector<36xf32>
    %190 = vector.shape_cast %189 : vector<36xf32> to vector<36x1xf32>
    %cst_79 = arith.constant dense<0.000000e+00> : vector<1xf32>
    %191 = vector.multi_reduction <add>, %190, %cst_79 [0] : vector<36x1xf32> to vector<1xf32>
    %192 = vector.shape_cast %191 : vector<1xf32> to vector<1x1xf32>
    %c2_i32_80 = arith.constant 2 : i32
    %193 = vector.broadcast %c2_i32_80 : i32 to vector<1x10xi32>
    %194 = arith.cmpi eq, %0, %193 : vector<1x10xi32>
    %cst_81 = arith.constant 0.000000e+00 : f32
    %195 = vector.shape_cast %192 : vector<1x1xf32> to vector<1x1xf32>
    %196 = vector.broadcast %195 : vector<1x1xf32> to vector<1x10xf32>
    %197 = vector.broadcast %cst_81 : f32 to vector<1x10xf32>
    %198 = arith.select %194, %196, %197 : vector<1x10xi1>, vector<1x10xf32>
    %199 = arith.addf %185, %198 : vector<1x10xf32>
    %c3_82 = arith.constant 3 : index
    %c0_83 = arith.constant 0 : index
    %c0_84 = arith.constant 0 : index
    %200 = vector.load %arg2[%c3_82, %c0_83, %c0_84] : memref<10x36x529xf32, #tpu.memory_space<vmem>>, vector<1x36x529xf32>
    %201 = vector.shape_cast %200 : vector<1x36x529xf32> to vector<36x529xf32>
    %202 = arith.mulf %156, %201 : vector<36x529xf32>
    %cst_85 = arith.constant dense<0.000000e+00> : vector<36xf32>
    %203 = vector.multi_reduction <add>, %202, %cst_85 [1] : vector<36x529xf32> to vector<36xf32>
    %204 = vector.shape_cast %203 : vector<36xf32> to vector<36x1xf32>
    %cst_86 = arith.constant dense<0.000000e+00> : vector<1xf32>
    %205 = vector.multi_reduction <add>, %204, %cst_86 [0] : vector<36x1xf32> to vector<1xf32>
    %206 = vector.shape_cast %205 : vector<1xf32> to vector<1x1xf32>
    %c3_i32_87 = arith.constant 3 : i32
    %207 = vector.broadcast %c3_i32_87 : i32 to vector<1x10xi32>
    %208 = arith.cmpi eq, %0, %207 : vector<1x10xi32>
    %cst_88 = arith.constant 0.000000e+00 : f32
    %209 = vector.shape_cast %206 : vector<1x1xf32> to vector<1x1xf32>
    %210 = vector.broadcast %209 : vector<1x1xf32> to vector<1x10xf32>
    %211 = vector.broadcast %cst_88 : f32 to vector<1x10xf32>
    %212 = arith.select %208, %210, %211 : vector<1x10xi1>, vector<1x10xf32>
    %213 = arith.addf %199, %212 : vector<1x10xf32>
    %c4_89 = arith.constant 4 : index
    %c0_90 = arith.constant 0 : index
    %c0_91 = arith.constant 0 : index
    %214 = vector.load %arg2[%c4_89, %c0_90, %c0_91] : memref<10x36x529xf32, #tpu.memory_space<vmem>>, vector<1x36x529xf32>
    %215 = vector.shape_cast %214 : vector<1x36x529xf32> to vector<36x529xf32>
    %216 = arith.mulf %156, %215 : vector<36x529xf32>
    %cst_92 = arith.constant dense<0.000000e+00> : vector<36xf32>
    %217 = vector.multi_reduction <add>, %216, %cst_92 [1] : vector<36x529xf32> to vector<36xf32>
    %218 = vector.shape_cast %217 : vector<36xf32> to vector<36x1xf32>
    %cst_93 = arith.constant dense<0.000000e+00> : vector<1xf32>
    %219 = vector.multi_reduction <add>, %218, %cst_93 [0] : vector<36x1xf32> to vector<1xf32>
    %220 = vector.shape_cast %219 : vector<1xf32> to vector<1x1xf32>
    %c4_i32_94 = arith.constant 4 : i32
    %221 = vector.broadcast %c4_i32_94 : i32 to vector<1x10xi32>
    %222 = arith.cmpi eq, %0, %221 : vector<1x10xi32>
    %cst_95 = arith.constant 0.000000e+00 : f32
    %223 = vector.shape_cast %220 : vector<1x1xf32> to vector<1x1xf32>
    %224 = vector.broadcast %223 : vector<1x1xf32> to vector<1x10xf32>
    %225 = vector.broadcast %cst_95 : f32 to vector<1x10xf32>
    %226 = arith.select %222, %224, %225 : vector<1x10xi1>, vector<1x10xf32>
    %227 = arith.addf %213, %226 : vector<1x10xf32>
    %c5_96 = arith.constant 5 : index
    %c0_97 = arith.constant 0 : index
    %c0_98 = arith.constant 0 : index
    %228 = vector.load %arg2[%c5_96, %c0_97, %c0_98] : memref<10x36x529xf32, #tpu.memory_space<vmem>>, vector<1x36x529xf32>
    %229 = vector.shape_cast %228 : vector<1x36x529xf32> to vector<36x529xf32>
    %230 = arith.mulf %156, %229 : vector<36x529xf32>
    %cst_99 = arith.constant dense<0.000000e+00> : vector<36xf32>
    %231 = vector.multi_reduction <add>, %230, %cst_99 [1] : vector<36x529xf32> to vector<36xf32>
    %232 = vector.shape_cast %231 : vector<36xf32> to vector<36x1xf32>
    %cst_100 = arith.constant dense<0.000000e+00> : vector<1xf32>
    %233 = vector.multi_reduction <add>, %232, %cst_100 [0] : vector<36x1xf32> to vector<1xf32>
    %234 = vector.shape_cast %233 : vector<1xf32> to vector<1x1xf32>
    %c5_i32_101 = arith.constant 5 : i32
    %235 = vector.broadcast %c5_i32_101 : i32 to vector<1x10xi32>
    %236 = arith.cmpi eq, %0, %235 : vector<1x10xi32>
    %cst_102 = arith.constant 0.000000e+00 : f32
    %237 = vector.shape_cast %234 : vector<1x1xf32> to vector<1x1xf32>
    %238 = vector.broadcast %237 : vector<1x1xf32> to vector<1x10xf32>
    %239 = vector.broadcast %cst_102 : f32 to vector<1x10xf32>
    %240 = arith.select %236, %238, %239 : vector<1x10xi1>, vector<1x10xf32>
    %241 = arith.addf %227, %240 : vector<1x10xf32>
    %c6_103 = arith.constant 6 : index
    %c0_104 = arith.constant 0 : index
    %c0_105 = arith.constant 0 : index
    %242 = vector.load %arg2[%c6_103, %c0_104, %c0_105] : memref<10x36x529xf32, #tpu.memory_space<vmem>>, vector<1x36x529xf32>
    %243 = vector.shape_cast %242 : vector<1x36x529xf32> to vector<36x529xf32>
    %244 = arith.mulf %156, %243 : vector<36x529xf32>
    %cst_106 = arith.constant dense<0.000000e+00> : vector<36xf32>
    %245 = vector.multi_reduction <add>, %244, %cst_106 [1] : vector<36x529xf32> to vector<36xf32>
    %246 = vector.shape_cast %245 : vector<36xf32> to vector<36x1xf32>
    %cst_107 = arith.constant dense<0.000000e+00> : vector<1xf32>
    %247 = vector.multi_reduction <add>, %246, %cst_107 [0] : vector<36x1xf32> to vector<1xf32>
    %248 = vector.shape_cast %247 : vector<1xf32> to vector<1x1xf32>
    %c6_i32_108 = arith.constant 6 : i32
    %249 = vector.broadcast %c6_i32_108 : i32 to vector<1x10xi32>
    %250 = arith.cmpi eq, %0, %249 : vector<1x10xi32>
    %cst_109 = arith.constant 0.000000e+00 : f32
    %251 = vector.shape_cast %248 : vector<1x1xf32> to vector<1x1xf32>
    %252 = vector.broadcast %251 : vector<1x1xf32> to vector<1x10xf32>
    %253 = vector.broadcast %cst_109 : f32 to vector<1x10xf32>
    %254 = arith.select %250, %252, %253 : vector<1x10xi1>, vector<1x10xf32>
    %255 = arith.addf %241, %254 : vector<1x10xf32>
    %c7_110 = arith.constant 7 : index
    %c0_111 = arith.constant 0 : index
    %c0_112 = arith.constant 0 : index
    %256 = vector.load %arg2[%c7_110, %c0_111, %c0_112] : memref<10x36x529xf32, #tpu.memory_space<vmem>>, vector<1x36x529xf32>
    %257 = vector.shape_cast %256 : vector<1x36x529xf32> to vector<36x529xf32>
    %258 = arith.mulf %156, %257 : vector<36x529xf32>
    %cst_113 = arith.constant dense<0.000000e+00> : vector<36xf32>
    %259 = vector.multi_reduction <add>, %258, %cst_113 [1] : vector<36x529xf32> to vector<36xf32>
    %260 = vector.shape_cast %259 : vector<36xf32> to vector<36x1xf32>
    %cst_114 = arith.constant dense<0.000000e+00> : vector<1xf32>
    %261 = vector.multi_reduction <add>, %260, %cst_114 [0] : vector<36x1xf32> to vector<1xf32>
    %262 = vector.shape_cast %261 : vector<1xf32> to vector<1x1xf32>
    %c7_i32_115 = arith.constant 7 : i32
    %263 = vector.broadcast %c7_i32_115 : i32 to vector<1x10xi32>
    %264 = arith.cmpi eq, %0, %263 : vector<1x10xi32>
    %cst_116 = arith.constant 0.000000e+00 : f32
    %265 = vector.shape_cast %262 : vector<1x1xf32> to vector<1x1xf32>
    %266 = vector.broadcast %265 : vector<1x1xf32> to vector<1x10xf32>
    %267 = vector.broadcast %cst_116 : f32 to vector<1x10xf32>
    %268 = arith.select %264, %266, %267 : vector<1x10xi1>, vector<1x10xf32>
    %269 = arith.addf %255, %268 : vector<1x10xf32>
    %c8_117 = arith.constant 8 : index
    %c0_118 = arith.constant 0 : index
    %c0_119 = arith.constant 0 : index
    %270 = vector.load %arg2[%c8_117, %c0_118, %c0_119] : memref<10x36x529xf32, #tpu.memory_space<vmem>>, vector<1x36x529xf32>
    %271 = vector.shape_cast %270 : vector<1x36x529xf32> to vector<36x529xf32>
    %272 = arith.mulf %156, %271 : vector<36x529xf32>
    %cst_120 = arith.constant dense<0.000000e+00> : vector<36xf32>
    %273 = vector.multi_reduction <add>, %272, %cst_120 [1] : vector<36x529xf32> to vector<36xf32>
    %274 = vector.shape_cast %273 : vector<36xf32> to vector<36x1xf32>
    %cst_121 = arith.constant dense<0.000000e+00> : vector<1xf32>
    %275 = vector.multi_reduction <add>, %274, %cst_121 [0] : vector<36x1xf32> to vector<1xf32>
    %276 = vector.shape_cast %275 : vector<1xf32> to vector<1x1xf32>
    %c8_i32_122 = arith.constant 8 : i32
    %277 = vector.broadcast %c8_i32_122 : i32 to vector<1x10xi32>
    %278 = arith.cmpi eq, %0, %277 : vector<1x10xi32>
    %cst_123 = arith.constant 0.000000e+00 : f32
    %279 = vector.shape_cast %276 : vector<1x1xf32> to vector<1x1xf32>
    %280 = vector.broadcast %279 : vector<1x1xf32> to vector<1x10xf32>
    %281 = vector.broadcast %cst_123 : f32 to vector<1x10xf32>
    %282 = arith.select %278, %280, %281 : vector<1x10xi1>, vector<1x10xf32>
    %283 = arith.addf %269, %282 : vector<1x10xf32>
    %c9_124 = arith.constant 9 : index
    %c0_125 = arith.constant 0 : index
    %c0_126 = arith.constant 0 : index
    %284 = vector.load %arg2[%c9_124, %c0_125, %c0_126] : memref<10x36x529xf32, #tpu.memory_space<vmem>>, vector<1x36x529xf32>
    %285 = vector.shape_cast %284 : vector<1x36x529xf32> to vector<36x529xf32>
    %286 = arith.mulf %156, %285 : vector<36x529xf32>
    %cst_127 = arith.constant dense<0.000000e+00> : vector<36xf32>
    %287 = vector.multi_reduction <add>, %286, %cst_127 [1] : vector<36x529xf32> to vector<36xf32>
    %288 = vector.shape_cast %287 : vector<36xf32> to vector<36x1xf32>
    %cst_128 = arith.constant dense<0.000000e+00> : vector<1xf32>
    %289 = vector.multi_reduction <add>, %288, %cst_128 [0] : vector<36x1xf32> to vector<1xf32>
    %290 = vector.shape_cast %289 : vector<1xf32> to vector<1x1xf32>
    %c9_i32_129 = arith.constant 9 : i32
    %291 = vector.broadcast %c9_i32_129 : i32 to vector<1x10xi32>
    %292 = arith.cmpi eq, %0, %291 : vector<1x10xi32>
    %cst_130 = arith.constant 0.000000e+00 : f32
    %293 = vector.shape_cast %290 : vector<1x1xf32> to vector<1x1xf32>
    %294 = vector.broadcast %293 : vector<1x1xf32> to vector<1x10xf32>
    %295 = vector.broadcast %cst_130 : f32 to vector<1x10xf32>
    %296 = arith.select %292, %294, %295 : vector<1x10xi1>, vector<1x10xf32>
    %297 = arith.addf %283, %296 : vector<1x10xf32>
    %cst_131 = arith.constant dense<0xFF800000> : vector<1xf32>
    %298 = vector.multi_reduction <maximumf>, %297, %cst_131 [1] : vector<1x10xf32> to vector<1xf32>
    %299 = vector.shape_cast %298 : vector<1xf32> to vector<1x1xf32>
    %300 = vector.broadcast %299 : vector<1x1xf32> to vector<1x10xf32>
    %301 = arith.subf %297, %300 : vector<1x10xf32>
    %302 = math.exp %301 : vector<1x10xf32>
    %cst_132 = arith.constant dense<0.000000e+00> : vector<1xf32>
    %303 = vector.multi_reduction <add>, %302, %cst_132 [1] : vector<1x10xf32> to vector<1xf32>
    %304 = vector.shape_cast %303 : vector<1xf32> to vector<1x1xf32>
    %305 = math.log %304 : vector<1x1xf32>
    %306 = vector.broadcast %305 : vector<1x1xf32> to vector<1x10xf32>
    %307 = arith.subf %301, %306 : vector<1x10xf32>
    %c1_133 = arith.constant 1 : index
    %c0_134 = arith.constant 0 : index
    %308 = vector.load %arg3[%c1_133, %c0_134] : memref<2x10xf32, #tpu.memory_space<vmem>>, vector<1x10xf32>
    tpu.vector_store %arg3[%c1_133, %c0_134], %307 {strides = array<i32>} : memref<2x10xf32, #tpu.memory_space<vmem>>, vector<1x10xf32>,
    return
  }
  func.func @transform_0(%arg0: i32) -> (i32, i32, i32) {
    %c0_i32 = arith.constant 0 : i32
    %c0_i32_0 = arith.constant 0 : i32
    %c0_i32_1 = arith.constant 0 : i32
    %c0_i32_2 = arith.constant 0 : i32
    return %c0_i32, %c0_i32_0, %c0_i32_1 : i32, i32, i32
  }
  func.func @transform_1(%arg0: i32) -> (i32, i32, i32) {
    %c0_i32 = arith.constant 0 : i32
    %c0_i32_0 = arith.constant 0 : i32
    %c0_i32_1 = arith.constant 0 : i32
    %c0_i32_2 = arith.constant 0 : i32
    return %c0_i32, %c0_i32_0, %c0_i32_1 : i32, i32, i32
  }
  func.func @transform_2(%arg0: i32) -> (i32, i32) {
    %c0_i32 = arith.constant 0 : i32
    %c0_i32_0 = arith.constant 0 : i32
    %c0_i32_1 = arith.constant 0 : i32
    return %c0_i32, %c0_i32_0 : i32, i32
  }
}

</mosaic_0001>

<llo_original>
// kernel: conv2d_then_linear.1
$region0: #{conv2d_then_linear.1}
  #allocation0 [shape = 'u32[]', space=smem, size = 0x4, offset = 0x4, fixed_abs, tag = 'smem constant byte address 0x4 - core index']
  #allocation1 [shape = 'u32[144,128]{1,0:T(1,128)}', space=vmem, size = 0x12000, scoped, tag = 'internal scratch']
  %s0 = inlined_call_operand.vmem [shape: f32[2,36,529], index: 0, kind: input, shape index: {}]
  %s1 = inlined_call_operand.vmem [shape: f32[10,36,529], index: 1, kind: input, shape index: {}]
  %s2 = inlined_call_operand.hbm [shape: f32[2,10], index: 2, kind: output, shape index: {}]
  %s3 = sld [smem:[#allocation0]]
  $region18: #{conv2d_then_linear.1} parent=0
    _
  %s5 = ssub.s32 1, %s3
  %s6 = scalar_select 0, %s5, %s3
  $region1: #{conv2d_then_linear.1} parent=0
    #allocation2 [shape = 'u8[1024]{0}', space=vmem, size = 0x400, scoped, tag = 'output window, operand 0, single buffered']
    #allocation3 [shape = 's32[1]{0}', space=sflag, size = 0x4, scoped, tag = 'scoped memory for conv2d_then_linear.1']
    %7 = vsyncpa [#allocation3], 0
    // Predicated region
    $region2: #{conv2d_then_linear.1} parent=1 // pred_check
      _
    $region3: #{conv2d_then_linear.1} parent=1 // pred_check_branch
      %9 = sbr.rel (0) target = $region5
    $region4: #{conv2d_then_linear.1} parent=1 // pred_region
      _
    $region5: #{conv2d_then_linear.1} parent=1 // pred_fallthru
      _
    // Predicated region
    $region6: #{conv2d_then_linear.1} parent=1 // pred_check
      _
    $region7: #{conv2d_then_linear.1} parent=1 // pred_check_branch
      %11 = sbr.rel (0) target = $region9
    $region8: #{conv2d_then_linear.1} parent=1 // pred_region
      _
    $region9: #{conv2d_then_linear.1} parent=1 // pred_fallthru
      _
    %v12 = vlaneseq
    %v13 = vand.u32 %v12, 127
    %v14 = vld [vmem:[%s0] sm:$0xff]
    %v15 = vld [vmem:[%s0 + $0x8] sm:$0xff]
    %v16 = vld [vmem:[%s0 + $0x10] sm:$0xff]
    %v17 = vld [vmem:[%s0 + $0x18] sm:$0xff]
    %v18 = vld [vmem:[%s0 + $0x20] sm:$0xff]
    %v19 = vld [vmem:[%s0 + $0x28] sm:$0xff]
    %v20 = vld [vmem:[%s0 + $0x30] sm:$0xff]
    %v21 = vld [vmem:[%s0 + $0x38] sm:$0xff]
    %v22 = vld [vmem:[%s0 + $0x40] sm:$0xff]
    %v23 = vld [vmem:[%s0 + $0x48] sm:$0xff]
    %v24 = vld [vmem:[%s0 + $0x50] sm:$0xff]
    %v25 = vld [vmem:[%s0 + $0x58] sm:$0xff]
    %v26 = vld [vmem:[%s0 + $0x60] sm:$0xff]
    %v27 = vld [vmem:[%s0 + $0x68] sm:$0xff]
    %v28 = vld [vmem:[%s0 + $0x70] sm:$0xff]
    %v29 = vld [vmem:[%s0 + $0x78] sm:$0xff]
    %v30 = vld [vmem:[%s0 + $0x80] sm:$0xff]
    %v31 = vld [vmem:[%s0 + $0x88] sm:$0xff]
    %v32 = vld [vmem:[%s0 + $0x90] sm:$0xff]
    %v33 = vld [vmem:[%s0 + $0x98] sm:$0xff]
    %v34 = vld [vmem:[%s0 + $0xa0] sm:$0xf]
    %v35 = vld [vmem:[%s0 + $0xa8] sm:$0xf]
    %v36 = vld [vmem:[%s0 + $0xb0] sm:$0xf]
    %v37 = vld [vmem:[%s0 + $0xb8] sm:$0xf]
    %v38 = vld [vmem:[%s0 + $0xc0] sm:$0xf]
    %v39 = vld [vmem:[%s1] sm:$0xff]
    %v40 = vld [vmem:[%s1 + $0x8] sm:$0xff]
    %v41 = vld [vmem:[%s1 + $0x10] sm:$0xff]
    %v42 = vld [vmem:[%s1 + $0x18] sm:$0xff]
    %v43 = vld [vmem:[%s1 + $0x20] sm:$0xff]
    %v44 = vld [vmem:[%s1 + $0x28] sm:$0xff]
    %v45 = vld [vmem:[%s1 + $0x30] sm:$0xff]
    %v46 = vld [vmem:[%s1 + $0x38] sm:$0xff]
    %v47 = vld [vmem:[%s1 + $0x40] sm:$0xff]
    %v48 = vld [vmem:[%s1 + $0x48] sm:$0xff]
    %v49 = vld [vmem:[%s1 + $0x50] sm:$0xff]
    %v50 = vld [vmem:[%s1 + $0x58] sm:$0xff]
    %v51 = vld [vmem:[%s1 + $0x60] sm:$0xff]
    %v52 = vld [vmem:[%s1 + $0x68] sm:$0xff]
    %v53 = vld [vmem:[%s1 + $0x70] sm:$0xff]
    %v54 = vld [vmem:[%s1 + $0x78] sm:$0xff]
    %v55 = vld [vmem:[%s1 + $0x80] sm:$0xff]
    %v56 = vld [vmem:[%s1 + $0x88] sm:$0xff]
    %v57 = vld [vmem:[%s1 + $0x90] sm:$0xff]
    %v58 = vld [vmem:[%s1 + $0x98] sm:$0xff]
    %v59 = vld [vmem:[%s1 + $0xa0] sm:$0xf]
    %v60 = vld [vmem:[%s1 + $0xa8] sm:$0xf]
    %v61 = vld [vmem:[%s1 + $0xb0] sm:$0xf]
    %v62 = vld [vmem:[%s1 + $0xb8] sm:$0xf]
    %v63 = vld [vmem:[%s1 + $0xc0] sm:$0xf]
    %v64 = vmul.f32 %v14, %v39
    %v65 = vmul.f32 %v15, %v40
    %v66 = vmul.f32 %v16, %v41
    %v67 = vmul.f32 %v17, %v42
    %v68 = vmul.f32 %v18, %v43
    %v69 = vmul.f32 %v19, %v44
    %v70 = vmul.f32 %v20, %v45
    %v71 = vmul.f32 %v21, %v46
    %v72 = vmul.f32 %v22, %v47
    %v73 = vmul.f32 %v23, %v48
    %v74 = vmul.f32 %v24, %v49
    %v75 = vmul.f32 %v25, %v50
    %v76 = vmul.f32 %v26, %v51
    %v77 = vmul.f32 %v27, %v52
    %v78 = vmul.f32 %v28, %v53
    %v79 = vmul.f32 %v29, %v54
    %v80 = vmul.f32 %v30, %v55
    %v81 = vmul.f32 %v31, %v56
    %v82 = vmul.f32 %v32, %v57
    %v83 = vmul.f32 %v33, %v58
    %v84 = vmul.f32 %v34, %v59
    %v85 = vmul.f32 %v35, %v60
    %v86 = vmul.f32 %v36, %v61
    %v87 = vmul.f32 %v37, %v62
    %v88 = vmul.f32 %v38, %v63
    %v89 = vadd.f32 %v64, %v65
    %v90 = vadd.f32 %v89, %v66
    %v91 = vadd.f32 %v90, %v67
    %vm92 = vcmask 138240
    %v93 = vsel %vm92, %v68, 0.0
    %v94 = vadd.f32 %v91, %v93
    %95 = vadd.xlane.f32.xlu0 %v94
    %v96 = vpop.xlane.xlu0 %95
    %v97 = vadd.f32 %v69, %v70
    %v98 = vadd.f32 %v97, %v71
    %v99 = vadd.f32 %v98, %v72
    %v100 = vsel %vm92, %v73, 0.0
    %v101 = vadd.f32 %v99, %v100
    %102 = vadd.xlane.f32.xlu0 %v101
    %v103 = vpop.xlane.xlu0 %102
    %v104 = vadd.f32 %v74, %v75
    %v105 = vadd.f32 %v104, %v76
    %v106 = vadd.f32 %v105, %v77
    %v107 = vsel %vm92, %v78, 0.0
    %v108 = vadd.f32 %v106, %v107
    %109 = vadd.xlane.f32.xlu0 %v108
    %v110 = vpop.xlane.xlu0 %109
    %v111 = vadd.f32 %v79, %v80
    %v112 = vadd.f32 %v111, %v81
    %v113 = vadd.f32 %v112, %v82
    %v114 = vsel %vm92, %v83, 0.0
    %v115 = vadd.f32 %v113, %v114
    %116 = vadd.xlane.f32.xlu0 %v115
    %v117 = vpop.xlane.xlu0 %116
    %vm118 = vcmask 1043456
    %v119 = vsel %vm118, %v84, 0.0
    %v120 = vsel %vm118, %v85, 0.0
    %v121 = vadd.f32 %v119, %v120
    %v122 = vsel %vm118, %v86, 0.0
    %v123 = vadd.f32 %v121, %v122
    %v124 = vsel %vm118, %v87, 0.0
    %v125 = vadd.f32 %v123, %v124
    %vm126 = vcmask 134144
    %v127 = vsel %vm126, %v88, 0.0
    %v128 = vadd.f32 %v125, %v127
    %129 = vadd.xlane.f32.xlu0 %v128
    %v130 = vpop.xlane.xlu0 %129
    %v131 = vadd.f32 %v96, %v103
    %v132 = vadd.f32 %v131, %v110
    %v133 = vadd.f32 %v132, %v117
    %v134 = vsel %vm118, %v130, 0.0
    %v135 = vadd.f32 %v133, %v134
    %v136 = vrot.slane %v135, 4
    %v137 = vadd.f32 %v135, %v136
    %v138 = vrot.slane %v137, 2
    %v139 = vadd.f32 %v137, %v138
    %v140 = vrot.slane %v139, 1
    %v141 = vadd.f32 %v139, %v140
    %vm142 = vcmp.eq.s32.totalorder %v13, 0
    %v143 = vsel %vm142, %v141, 0.0
    %v144 = vadd.f32 %v143, 0.0
    %s145 = scalar_lea.vmem %s1, 200
    %v146 = vld [vmem:[%s145] sm:$0xff]
    %v147 = vld [vmem:[%s145 + $0x8] sm:$0xff]
    %v148 = vld [vmem:[%s145 + $0x10] sm:$0xff]
    %v149 = vld [vmem:[%s145 + $0x18] sm:$0xff]
    %v150 = vld [vmem:[%s145 + $0x20] sm:$0xff]
    %v151 = vld [vmem:[%s145 + $0x28] sm:$0xff]
    %v152 = vld [vmem:[%s145 + $0x30] sm:$0xff]
    %v153 = vld [vmem:[%s145 + $0x38] sm:$0xff]
    %v154 = vld [vmem:[%s145 + $0x40] sm:$0xff]
    %v155 = vld [vmem:[%s145 + $0x48] sm:$0xff]
    %v156 = vld [vmem:[%s145 + $0x50] sm:$0xff]
    %v157 = vld [vmem:[%s145 + $0x58] sm:$0xff]
    %v158 = vld [vmem:[%s145 + $0x60] sm:$0xff]
    %v159 = vld [vmem:[%s145 + $0x68] sm:$0xff]
    %v160 = vld [vmem:[%s145 + $0x70] sm:$0xff]
    %v161 = vld [vmem:[%s145 + $0x78] sm:$0xff]
    %v162 = vld [vmem:[%s145 + $0x80] sm:$0xff]
    %v163 = vld [vmem:[%s145 + $0x88] sm:$0xff]
    %v164 = vld [vmem:[%s145 + $0x90] sm:$0xff]
    %v165 = vld [vmem:[%s145 + $0x98] sm:$0xff]
    %v166 = vld [vmem:[%s145 + $0xa0] sm:$0xf]
    %v167 = vld [vmem:[%s145 + $0xa8] sm:$0xf]
    %v168 = vld [vmem:[%s145 + $0xb0] sm:$0xf]
    %v169 = vld [vmem:[%s145 + $0xb8] sm:$0xf]
    %v170 = vld [vmem:[%s145 + $0xc0] sm:$0xf]
    %v171 = vmul.f32 %v14, %v146
    %v172 = vmul.f32 %v15, %v147
    %v173 = vmul.f32 %v16, %v148
    %v174 = vmul.f32 %v17, %v149
    %v175 = vmul.f32 %v18, %v150
    %v176 = vmul.f32 %v19, %v151
    %v177 = vmul.f32 %v20, %v152
    %v178 = vmul.f32 %v21, %v153
    %v179 = vmul.f32 %v22, %v154
    %v180 = vmul.f32 %v23, %v155
    %v181 = vmul.f32 %v24, %v156
    %v182 = vmul.f32 %v25, %v157
    %v183 = vmul.f32 %v26, %v158
    %v184 = vmul.f32 %v27, %v159
    %v185 = vmul.f32 %v28, %v160
    %v186 = vmul.f32 %v29, %v161
    %v187 = vmul.f32 %v30, %v162
    %v188 = vmul.f32 %v31, %v163
    %v189 = vmul.f32 %v32, %v164
    %v190 = vmul.f32 %v33, %v165
    %v191 = vmul.f32 %v34, %v166
    %v192 = vmul.f32 %v35, %v167
    %v193 = vmul.f32 %v36, %v168
    %v194 = vmul.f32 %v37, %v169
    %v195 = vmul.f32 %v38, %v170
    %v196 = vadd.f32 %v171, %v172
    %v197 = vadd.f32 %v196, %v173
    %v198 = vadd.f32 %v197, %v174
    %v199 = vsel %vm92, %v175, 0.0
    %v200 = vadd.f32 %v198, %v199
    %201 = vadd.xlane.f32.xlu0 %v200
    %v202 = vpop.xlane.xlu0 %201
    %v203 = vadd.f32 %v176, %v177
    %v204 = vadd.f32 %v203, %v178
    %v205 = vadd.f32 %v204, %v179
    %v206 = vsel %vm92, %v180, 0.0
    %v207 = vadd.f32 %v205, %v206
    %208 = vadd.xlane.f32.xlu0 %v207
    %v209 = vpop.xlane.xlu0 %208
    %v210 = vadd.f32 %v181, %v182
    %v211 = vadd.f32 %v210, %v183
    %v212 = vadd.f32 %v211, %v184
    %v213 = vsel %vm92, %v185, 0.0
    %v214 = vadd.f32 %v212, %v213
    %215 = vadd.xlane.f32.xlu0 %v214
    %v216 = vpop.xlane.xlu0 %215
    %v217 = vadd.f32 %v186, %v187
    %v218 = vadd.f32 %v217, %v188
    %v219 = vadd.f32 %v218, %v189
    %v220 = vsel %vm92, %v190, 0.0
    %v221 = vadd.f32 %v219, %v220
    %222 = vadd.xlane.f32.xlu0 %v221
    %v223 = vpop.xlane.xlu0 %222
    %v224 = vsel %vm118, %v191, 0.0
    %v225 = vsel %vm118, %v192, 0.0
    %v226 = vadd.f32 %v224, %v225
    %v227 = vsel %vm118, %v193, 0.0
    %v228 = vadd.f32 %v226, %v227
    %v229 = vsel %vm118, %v194, 0.0
    %v230 = vadd.f32 %v228, %v229
    %v231 = vsel %vm126, %v195, 0.0
    %v232 = vadd.f32 %v230, %v231
    %233 = vadd.xlane.f32.xlu0 %v232
    %v234 = vpop.xlane.xlu0 %233
    %v235 = vadd.f32 %v202, %v209
    %v236 = vadd.f32 %v235, %v216
    %v237 = vadd.f32 %v236, %v223
    %v238 = vsel %vm118, %v234, 0.0
    %v239 = vadd.f32 %v237, %v238
    %v240 = vrot.slane %v239, 4
    %v241 = vadd.f32 %v239, %v240
    %v242 = vrot.slane %v241, 2
    %v243 = vadd.f32 %v241, %v242
    %v244 = vrot.slane %v243, 1
    %v245 = vadd.f32 %v243, %v244
    %vm246 = vcmp.eq.s32.totalorder %v13, 1
    %v247 = vsel %vm246, %v245, 0.0
    %v248 = vadd.f32 %v144, %v247
    %s249 = scalar_lea.vmem %s1, 400
    %v250 = vld [vmem:[%s249] sm:$0xff]
    %v251 = vld [vmem:[%s249 + $0x8] sm:$0xff]
    %v252 = vld [vmem:[%s249 + $0x10] sm:$0xff]
    %v253 = vld [vmem:[%s249 + $0x18] sm:$0xff]
    %v254 = vld [vmem:[%s249 + $0x20] sm:$0xff]
    %v255 = vld [vmem:[%s249 + $0x28] sm:$0xff]
    %v256 = vld [vmem:[%s249 + $0x30] sm:$0xff]
    %v257 = vld [vmem:[%s249 + $0x38] sm:$0xff]
    %v258 = vld [vmem:[%s249 + $0x40] sm:$0xff]
    %v259 = vld [vmem:[%s249 + $0x48] sm:$0xff]
    %v260 = vld [vmem:[%s249 + $0x50] sm:$0xff]
    %v261 = vld [vmem:[%s249 + $0x58] sm:$0xff]
    %v262 = vld [vmem:[%s249 + $0x60] sm:$0xff]
    %v263 = vld [vmem:[%s249 + $0x68] sm:$0xff]
    %v264 = vld [vmem:[%s249 + $0x70] sm:$0xff]
    %v265 = vld [vmem:[%s249 + $0x78] sm:$0xff]
    %v266 = vld [vmem:[%s249 + $0x80] sm:$0xff]
    %v267 = vld [vmem:[%s249 + $0x88] sm:$0xff]
    %v268 = vld [vmem:[%s249 + $0x90] sm:$0xff]
    %v269 = vld [vmem:[%s249 + $0x98] sm:$0xff]
    %v270 = vld [vmem:[%s249 + $0xa0] sm:$0xf]
    %v271 = vld [vmem:[%s249 + $0xa8] sm:$0xf]
    %v272 = vld [vmem:[%s249 + $0xb0] sm:$0xf]
    %v273 = vld [vmem:[%s249 + $0xb8] sm:$0xf]
    %v274 = vld [vmem:[%s249 + $0xc0] sm:$0xf]
    %v275 = vmul.f32 %v14, %v250
    %v276 = vmul.f32 %v15, %v251
    %v277 = vmul.f32 %v16, %v252
    %v278 = vmul.f32 %v17, %v253
    %v279 = vmul.f32 %v18, %v254
    %v280 = vmul.f32 %v19, %v255
    %v281 = vmul.f32 %v20, %v256
    %v282 = vmul.f32 %v21, %v257
    %v283 = vmul.f32 %v22, %v258
    %v284 = vmul.f32 %v23, %v259
    %v285 = vmul.f32 %v24, %v260
    %v286 = vmul.f32 %v25, %v261
    %v287 = vmul.f32 %v26, %v262
    %v288 = vmul.f32 %v27, %v263
    %v289 = vmul.f32 %v28, %v264
    %v290 = vmul.f32 %v29, %v265
    %v291 = vmul.f32 %v30, %v266
    %v292 = vmul.f32 %v31, %v267
    %v293 = vmul.f32 %v32, %v268
    %v294 = vmul.f32 %v33, %v269
    %v295 = vmul.f32 %v34, %v270
    %v296 = vmul.f32 %v35, %v271
    %v297 = vmul.f32 %v36, %v272
    %v298 = vmul.f32 %v37, %v273
    %v299 = vmul.f32 %v38, %v274
    %v300 = vadd.f32 %v275, %v276
    %v301 = vadd.f32 %v300, %v277
    %v302 = vadd.f32 %v301, %v278
    %v303 = vsel %vm92, %v279, 0.0
    %v304 = vadd.f32 %v302, %v303
    %305 = vadd.xlane.f32.xlu0 %v304
    %v306 = vpop.xlane.xlu0 %305
    %v307 = vadd.f32 %v280, %v281
    %v308 = vadd.f32 %v307, %v282
    %v309 = vadd.f32 %v308, %v283
    %v310 = vsel %vm92, %v284, 0.0
    %v311 = vadd.f32 %v309, %v310
    %312 = vadd.xlane.f32.xlu0 %v311
    %v313 = vpop.xlane.xlu0 %312
    %v314 = vadd.f32 %v285, %v286
    %v315 = vadd.f32 %v314, %v287
    %v316 = vadd.f32 %v315, %v288
    %v317 = vsel %vm92, %v289, 0.0
    %v318 = vadd.f32 %v316, %v317
    %319 = vadd.xlane.f32.xlu0 %v318
    %v320 = vpop.xlane.xlu0 %319
    %v321 = vadd.f32 %v290, %v291
    %v322 = vadd.f32 %v321, %v292
    %v323 = vadd.f32 %v322, %v293
    %v324 = vsel %vm92, %v294, 0.0
    %v325 = vadd.f32 %v323, %v324
    %326 = vadd.xlane.f32.xlu0 %v325
    %v327 = vpop.xlane.xlu0 %326
    %v328 = vsel %vm118, %v295, 0.0
    %v329 = vsel %vm118, %v296, 0.0
    %v330 = vadd.f32 %v328, %v329
    %v331 = vsel %vm118, %v297, 0.0
    %v332 = vadd.f32 %v330, %v331
    %v333 = vsel %vm118, %v298, 0.0
    %v334 = vadd.f32 %v332, %v333
    %v335 = vsel %vm126, %v299, 0.0
    %v336 = vadd.f32 %v334, %v335
    %337 = vadd.xlane.f32.xlu0 %v336
    %v338 = vpop.xlane.xlu0 %337
    %v339 = vadd.f32 %v306, %v313
    %v340 = vadd.f32 %v339, %v320
    %v341 = vadd.f32 %v340, %v327
    %v342 = vsel %vm118, %v338, 0.0
    %v343 = vadd.f32 %v341, %v342
    %v344 = vrot.slane %v343, 4
    %v345 = vadd.f32 %v343, %v344
    %v346 = vrot.slane %v345, 2
    %v347 = vadd.f32 %v345, %v346
    %v348 = vrot.slane %v347, 1
    %v349 = vadd.f32 %v347, %v348
    %vm350 = vcmp.eq.s32.totalorder %v13, 2
    %v351 = vsel %vm350, %v349, 0.0
    %v352 = vadd.f32 %v248, %v351
    %s353 = scalar_lea.vmem %s1, 600
    %v354 = vld [vmem:[%s353] sm:$0xff]
    %v355 = vld [vmem:[%s353 + $0x8] sm:$0xff]
    %v356 = vld [vmem:[%s353 + $0x10] sm:$0xff]
    %v357 = vld [vmem:[%s353 + $0x18] sm:$0xff]
    %v358 = vld [vmem:[%s353 + $0x20] sm:$0xff]
    %v359 = vld [vmem:[%s353 + $0x28] sm:$0xff]
    %v360 = vld [vmem:[%s353 + $0x30] sm:$0xff]
    %v361 = vld [vmem:[%s353 + $0x38] sm:$0xff]
    %v362 = vld [vmem:[%s353 + $0x40] sm:$0xff]
    %v363 = vld [vmem:[%s353 + $0x48] sm:$0xff]
    %v364 = vld [vmem:[%s353 + $0x50] sm:$0xff]
    %v365 = vld [vmem:[%s353 + $0x58] sm:$0xff]
    %v366 = vld [vmem:[%s353 + $0x60] sm:$0xff]
    %v367 = vld [vmem:[%s353 + $0x68] sm:$0xff]
    %v368 = vld [vmem:[%s353 + $0x70] sm:$0xff]
    %v369 = vld [vmem:[%s353 + $0x78] sm:$0xff]
    %v370 = vld [vmem:[%s353 + $0x80] sm:$0xff]
    %v371 = vld [vmem:[%s353 + $0x88] sm:$0xff]
    %v372 = vld [vmem:[%s353 + $0x90] sm:$0xff]
    %v373 = vld [vmem:[%s353 + $0x98] sm:$0xff]
    %v374 = vld [vmem:[%s353 + $0xa0] sm:$0xf]
    %v375 = vld [vmem:[%s353 + $0xa8] sm:$0xf]
    %v376 = vld [vmem:[%s353 + $0xb0] sm:$0xf]
    %v377 = vld [vmem:[%s353 + $0xb8] sm:$0xf]
    %v378 = vld [vmem:[%s353 + $0xc0] sm:$0xf]
    %v379 = vmul.f32 %v14, %v354
    %v380 = vmul.f32 %v15, %v355
    %v381 = vmul.f32 %v16, %v356
    %v382 = vmul.f32 %v17, %v357
    %v383 = vmul.f32 %v18, %v358
    %v384 = vmul.f32 %v19, %v359
    %v385 = vmul.f32 %v20, %v360
    %v386 = vmul.f32 %v21, %v361
    %v387 = vmul.f32 %v22, %v362
    %v388 = vmul.f32 %v23, %v363
    %v389 = vmul.f32 %v24, %v364
    %v390 = vmul.f32 %v25, %v365
    %v391 = vmul.f32 %v26, %v366
    %v392 = vmul.f32 %v27, %v367
    %v393 = vmul.f32 %v28, %v368
    %v394 = vmul.f32 %v29, %v369
    %v395 = vmul.f32 %v30, %v370
    %v396 = vmul.f32 %v31, %v371
    %v397 = vmul.f32 %v32, %v372
    %v398 = vmul.f32 %v33, %v373
    %v399 = vmul.f32 %v34, %v374
    %v400 = vmul.f32 %v35, %v375
    %v401 = vmul.f32 %v36, %v376
    %v402 = vmul.f32 %v37, %v377
    %v403 = vmul.f32 %v38, %v378
    %v404 = vadd.f32 %v379, %v380
    %v405 = vadd.f32 %v404, %v381
    %v406 = vadd.f32 %v405, %v382
    %v407 = vsel %vm92, %v383, 0.0
    %v408 = vadd.f32 %v406, %v407
    %409 = vadd.xlane.f32.xlu0 %v408
    %v410 = vpop.xlane.xlu0 %409
    %v411 = vadd.f32 %v384, %v385
    %v412 = vadd.f32 %v411, %v386
    %v413 = vadd.f32 %v412, %v387
    %v414 = vsel %vm92, %v388, 0.0
    %v415 = vadd.f32 %v413, %v414
    %416 = vadd.xlane.f32.xlu0 %v415
    %v417 = vpop.xlane.xlu0 %416
    %v418 = vadd.f32 %v389, %v390
    %v419 = vadd.f32 %v418, %v391
    %v420 = vadd.f32 %v419, %v392
    %v421 = vsel %vm92, %v393, 0.0
    %v422 = vadd.f32 %v420, %v421
    %423 = vadd.xlane.f32.xlu0 %v422
    %v424 = vpop.xlane.xlu0 %423
    %v425 = vadd.f32 %v394, %v395
    %v426 = vadd.f32 %v425, %v396
    %v427 = vadd.f32 %v426, %v397
    %v428 = vsel %vm92, %v398, 0.0
    %v429 = vadd.f32 %v427, %v428
    %430 = vadd.xlane.f32.xlu0 %v429
    %v431 = vpop.xlane.xlu0 %430
    %v432 = vsel %vm118, %v399, 0.0
    %v433 = vsel %vm118, %v400, 0.0
    %v434 = vadd.f32 %v432, %v433
    %v435 = vsel %vm118, %v401, 0.0
    %v436 = vadd.f32 %v434, %v435
    %v437 = vsel %vm118, %v402, 0.0
    %v438 = vadd.f32 %v436, %v437
    %v439 = vsel %vm126, %v403, 0.0
    %v440 = vadd.f32 %v438, %v439
    %441 = vadd.xlane.f32.xlu0 %v440
    %v442 = vpop.xlane.xlu0 %441
    %v443 = vadd.f32 %v410, %v417
    %v444 = vadd.f32 %v443, %v424
    %v445 = vadd.f32 %v444, %v431
    %v446 = vsel %vm118, %v442, 0.0
    %v447 = vadd.f32 %v445, %v446
    %v448 = vrot.slane %v447, 4
    %v449 = vadd.f32 %v447, %v448
    %v450 = vrot.slane %v449, 2
    %v451 = vadd.f32 %v449, %v450
    %v452 = vrot.slane %v451, 1
    %v453 = vadd.f32 %v451, %v452
    %vm454 = vcmp.eq.s32.totalorder %v13, 3
    %v455 = vsel %vm454, %v453, 0.0
    %v456 = vadd.f32 %v352, %v455
    %s457 = scalar_lea.vmem %s1, 800
    %v458 = vld [vmem:[%s457] sm:$0xff]
    %v459 = vld [vmem:[%s457 + $0x8] sm:$0xff]
    %v460 = vld [vmem:[%s457 + $0x10] sm:$0xff]
    %v461 = vld [vmem:[%s457 + $0x18] sm:$0xff]
    %v462 = vld [vmem:[%s457 + $0x20] sm:$0xff]
    %v463 = vld [vmem:[%s457 + $0x28] sm:$0xff]
    %v464 = vld [vmem:[%s457 + $0x30] sm:$0xff]
    %v465 = vld [vmem:[%s457 + $0x38] sm:$0xff]
    %v466 = vld [vmem:[%s457 + $0x40] sm:$0xff]
    %v467 = vld [vmem:[%s457 + $0x48] sm:$0xff]
    %v468 = vld [vmem:[%s457 + $0x50] sm:$0xff]
    %v469 = vld [vmem:[%s457 + $0x58] sm:$0xff]
    %v470 = vld [vmem:[%s457 + $0x60] sm:$0xff]
    %v471 = vld [vmem:[%s457 + $0x68] sm:$0xff]
    %v472 = vld [vmem:[%s457 + $0x70] sm:$0xff]
    %v473 = vld [vmem:[%s457 + $0x78] sm:$0xff]
    %v474 = vld [vmem:[%s457 + $0x80] sm:$0xff]
    %v475 = vld [vmem:[%s457 + $0x88] sm:$0xff]
    %v476 = vld [vmem:[%s457 + $0x90] sm:$0xff]
    %v477 = vld [vmem:[%s457 + $0x98] sm:$0xff]
    %v478 = vld [vmem:[%s457 + $0xa0] sm:$0xf]
    %v479 = vld [vmem:[%s457 + $0xa8] sm:$0xf]
    %v480 = vld [vmem:[%s457 + $0xb0] sm:$0xf]
    %v481 = vld [vmem:[%s457 + $0xb8] sm:$0xf]
    %v482 = vld [vmem:[%s457 + $0xc0] sm:$0xf]
    %v483 = vmul.f32 %v14, %v458
    %v484 = vmul.f32 %v15, %v459
    %v485 = vmul.f32 %v16, %v460
    %v486 = vmul.f32 %v17, %v461
    %v487 = vmul.f32 %v18, %v462
    %v488 = vmul.f32 %v19, %v463
    %v489 = vmul.f32 %v20, %v464
    %v490 = vmul.f32 %v21, %v465
    %v491 = vmul.f32 %v22, %v466
    %v492 = vmul.f32 %v23, %v467
    %v493 = vmul.f32 %v24, %v468
    %v494 = vmul.f32 %v25, %v469
    %v495 = vmul.f32 %v26, %v470
    %v496 = vmul.f32 %v27, %v471
    %v497 = vmul.f32 %v28, %v472
    %v498 = vmul.f32 %v29, %v473
    %v499 = vmul.f32 %v30, %v474
    %v500 = vmul.f32 %v31, %v475
    %v501 = vmul.f32 %v32, %v476
    %v502 = vmul.f32 %v33, %v477
    %v503 = vmul.f32 %v34, %v478
    %v504 = vmul.f32 %v35, %v479
    %v505 = vmul.f32 %v36, %v480
    %v506 = vmul.f32 %v37, %v481
    %v507 = vmul.f32 %v38, %v482
    %v508 = vadd.f32 %v483, %v484
    %v509 = vadd.f32 %v508, %v485
    %v510 = vadd.f32 %v509, %v486
    %v511 = vsel %vm92, %v487, 0.0
    %v512 = vadd.f32 %v510, %v511
    %513 = vadd.xlane.f32.xlu0 %v512
    %v514 = vpop.xlane.xlu0 %513
    %v515 = vadd.f32 %v488, %v489
    %v516 = vadd.f32 %v515, %v490
    %v517 = vadd.f32 %v516, %v491
    %v518 = vsel %vm92, %v492, 0.0
    %v519 = vadd.f32 %v517, %v518
    %520 = vadd.xlane.f32.xlu0 %v519
    %v521 = vpop.xlane.xlu0 %520
    %v522 = vadd.f32 %v493, %v494
    %v523 = vadd.f32 %v522, %v495
    %v524 = vadd.f32 %v523, %v496
    %v525 = vsel %vm92, %v497, 0.0
    %v526 = vadd.f32 %v524, %v525
    %527 = vadd.xlane.f32.xlu0 %v526
    %v528 = vpop.xlane.xlu0 %527
    %v529 = vadd.f32 %v498, %v499
    %v530 = vadd.f32 %v529, %v500
    %v531 = vadd.f32 %v530, %v501
    %v532 = vsel %vm92, %v502, 0.0
    %v533 = vadd.f32 %v531, %v532
    %534 = vadd.xlane.f32.xlu0 %v533
    %v535 = vpop.xlane.xlu0 %534
    %v536 = vsel %vm118, %v503, 0.0
    %v537 = vsel %vm118, %v504, 0.0
    %v538 = vadd.f32 %v536, %v537
    %v539 = vsel %vm118, %v505, 0.0
    %v540 = vadd.f32 %v538, %v539
    %v541 = vsel %vm118, %v506, 0.0
    %v542 = vadd.f32 %v540, %v541
    %v543 = vsel %vm126, %v507, 0.0
    %v544 = vadd.f32 %v542, %v543
    %545 = vadd.xlane.f32.xlu0 %v544
    %v546 = vpop.xlane.xlu0 %545
    %v547 = vadd.f32 %v514, %v521
    %v548 = vadd.f32 %v547, %v528
    %v549 = vadd.f32 %v548, %v535
    %v550 = vsel %vm118, %v546, 0.0
    %v551 = vadd.f32 %v549, %v550
    %v552 = vrot.slane %v551, 4
    %v553 = vadd.f32 %v551, %v552
    %v554 = vrot.slane %v553, 2
    %v555 = vadd.f32 %v553, %v554
    %v556 = vrot.slane %v555, 1
    %v557 = vadd.f32 %v555, %v556
    %vm558 = vcmp.eq.s32.totalorder %v13, 4
    %v559 = vsel %vm558, %v557, 0.0
    %v560 = vadd.f32 %v456, %v559
    %s561 = scalar_lea.vmem %s1, 1000
    %v562 = vld [vmem:[%s561] sm:$0xff]
    %v563 = vld [vmem:[%s561 + $0x8] sm:$0xff]
    %v564 = vld [vmem:[%s561 + $0x10] sm:$0xff]
    %v565 = vld [vmem:[%s561 + $0x18] sm:$0xff]
    %v566 = vld [vmem:[%s561 + $0x20] sm:$0xff]
    %v567 = vld [vmem:[%s561 + $0x28] sm:$0xff]
    %v568 = vld [vmem:[%s561 + $0x30] sm:$0xff]
    %v569 = vld [vmem:[%s561 + $0x38] sm:$0xff]
    %v570 = vld [vmem:[%s561 + $0x40] sm:$0xff]
    %v571 = vld [vmem:[%s561 + $0x48] sm:$0xff]
    %v572 = vld [vmem:[%s561 + $0x50] sm:$0xff]
    %v573 = vld [vmem:[%s561 + $0x58] sm:$0xff]
    %v574 = vld [vmem:[%s561 + $0x60] sm:$0xff]
    %v575 = vld [vmem:[%s561 + $0x68] sm:$0xff]
    %v576 = vld [vmem:[%s561 + $0x70] sm:$0xff]
    %v577 = vld [vmem:[%s561 + $0x78] sm:$0xff]
    %v578 = vld [vmem:[%s561 + $0x80] sm:$0xff]
    %v579 = vld [vmem:[%s561 + $0x88] sm:$0xff]
    %v580 = vld [vmem:[%s561 + $0x90] sm:$0xff]
    %v581 = vld [vmem:[%s561 + $0x98] sm:$0xff]
    %v582 = vld [vmem:[%s561 + $0xa0] sm:$0xf]
    %v583 = vld [vmem:[%s561 + $0xa8] sm:$0xf]
    %v584 = vld [vmem:[%s561 + $0xb0] sm:$0xf]
    %v585 = vld [vmem:[%s561 + $0xb8] sm:$0xf]
    %v586 = vld [vmem:[%s561 + $0xc0] sm:$0xf]
    %v587 = vmul.f32 %v14, %v562
    %v588 = vmul.f32 %v15, %v563
    %v589 = vmul.f32 %v16, %v564
    %v590 = vmul.f32 %v17, %v565
    %v591 = vmul.f32 %v18, %v566
    %v592 = vmul.f32 %v19, %v567
    %v593 = vmul.f32 %v20, %v568
    %v594 = vmul.f32 %v21, %v569
    %v595 = vmul.f32 %v22, %v570
    %v596 = vmul.f32 %v23, %v571
    %v597 = vmul.f32 %v24, %v572
    %v598 = vmul.f32 %v25, %v573
    %v599 = vmul.f32 %v26, %v574
    %v600 = vmul.f32 %v27, %v575
    %v601 = vmul.f32 %v28, %v576
    %v602 = vmul.f32 %v29, %v577
    %v603 = vmul.f32 %v30, %v578
    %v604 = vmul.f32 %v31, %v579
    %v605 = vmul.f32 %v32, %v580
    %v606 = vmul.f32 %v33, %v581
    %v607 = vmul.f32 %v34, %v582
    %v608 = vmul.f32 %v35, %v583
    %v609 = vmul.f32 %v36, %v584
    %v610 = vmul.f32 %v37, %v585
    %v611 = vmul.f32 %v38, %v586
    %v612 = vadd.f32 %v587, %v588
    %v613 = vadd.f32 %v612, %v589
    %v614 = vadd.f32 %v613, %v590
    %v615 = vsel %vm92, %v591, 0.0
    %v616 = vadd.f32 %v614, %v615
    %617 = vadd.xlane.f32.xlu0 %v616
    %v618 = vpop.xlane.xlu0 %617
    %v619 = vadd.f32 %v592, %v593
    %v620 = vadd.f32 %v619, %v594
    %v621 = vadd.f32 %v620, %v595
    %v622 = vsel %vm92, %v596, 0.0
    %v623 = vadd.f32 %v621, %v622
    %624 = vadd.xlane.f32.xlu0 %v623
    %v625 = vpop.xlane.xlu0 %624
    %v626 = vadd.f32 %v597, %v598
    %v627 = vadd.f32 %v626, %v599
    %v628 = vadd.f32 %v627, %v600
    %v629 = vsel %vm92, %v601, 0.0
    %v630 = vadd.f32 %v628, %v629
    %631 = vadd.xlane.f32.xlu0 %v630
    %v632 = vpop.xlane.xlu0 %631
    %v633 = vadd.f32 %v602, %v603
    %v634 = vadd.f32 %v633, %v604
    %v635 = vadd.f32 %v634, %v605
    %v636 = vsel %vm92, %v606, 0.0
    %v637 = vadd.f32 %v635, %v636
    %638 = vadd.xlane.f32.xlu0 %v637
    %v639 = vpop.xlane.xlu0 %638
    %v640 = vsel %vm118, %v607, 0.0
    %v641 = vsel %vm118, %v608, 0.0
    %v642 = vadd.f32 %v640, %v641
    %v643 = vsel %vm118, %v609, 0.0
    %v644 = vadd.f32 %v642, %v643
    %v645 = vsel %vm118, %v610, 0.0
    %v646 = vadd.f32 %v644, %v645
    %v647 = vsel %vm126, %v611, 0.0
    %v648 = vadd.f32 %v646, %v647
    %649 = vadd.xlane.f32.xlu0 %v648
    %v650 = vpop.xlane.xlu0 %649
    %v651 = vadd.f32 %v618, %v625
    %v652 = vadd.f32 %v651, %v632
    %v653 = vadd.f32 %v652, %v639
    %v654 = vsel %vm118, %v650, 0.0
    %v655 = vadd.f32 %v653, %v654
    %v656 = vrot.slane %v655, 4
    %v657 = vadd.f32 %v655, %v656
    %v658 = vrot.slane %v657, 2
    %v659 = vadd.f32 %v657, %v658
    %v660 = vrot.slane %v659, 1
    %v661 = vadd.f32 %v659, %v660
    %vm662 = vcmp.eq.s32.totalorder %v13, 5
    %v663 = vsel %vm662, %v661, 0.0
    %v664 = vadd.f32 %v560, %v663
    %s665 = scalar_lea.vmem %s1, 1200
    %v666 = vld [vmem:[%s665] sm:$0xff]
    %v667 = vld [vmem:[%s665 + $0x8] sm:$0xff]
    %v668 = vld [vmem:[%s665 + $0x10] sm:$0xff]
    %v669 = vld [vmem:[%s665 + $0x18] sm:$0xff]
    %v670 = vld [vmem:[%s665 + $0x20] sm:$0xff]
    %v671 = vld [vmem:[%s665 + $0x28] sm:$0xff]
    %v672 = vld [vmem:[%s665 + $0x30] sm:$0xff]
    %v673 = vld [vmem:[%s665 + $0x38] sm:$0xff]
    %v674 = vld [vmem:[%s665 + $0x40] sm:$0xff]
    %v675 = vld [vmem:[%s665 + $0x48] sm:$0xff]
    %v676 = vld [vmem:[%s665 + $0x50] sm:$0xff]
    %v677 = vld [vmem:[%s665 + $0x58] sm:$0xff]
    %v678 = vld [vmem:[%s665 + $0x60] sm:$0xff]
    %v679 = vld [vmem:[%s665 + $0x68] sm:$0xff]
    %v680 = vld [vmem:[%s665 + $0x70] sm:$0xff]
    %v681 = vld [vmem:[%s665 + $0x78] sm:$0xff]
    %v682 = vld [vmem:[%s665 + $0x80] sm:$0xff]
    %v683 = vld [vmem:[%s665 + $0x88] sm:$0xff]
    %v684 = vld [vmem:[%s665 + $0x90] sm:$0xff]
    %v685 = vld [vmem:[%s665 + $0x98] sm:$0xff]
    %v686 = vld [vmem:[%s665 + $0xa0] sm:$0xf]
    %v687 = vld [vmem:[%s665 + $0xa8] sm:$0xf]
    %v688 = vld [vmem:[%s665 + $0xb0] sm:$0xf]
    %v689 = vld [vmem:[%s665 + $0xb8] sm:$0xf]
    %v690 = vld [vmem:[%s665 + $0xc0] sm:$0xf]
    %v691 = vmul.f32 %v14, %v666
    %v692 = vmul.f32 %v15, %v667
    %v693 = vmul.f32 %v16, %v668
    %v694 = vmul.f32 %v17, %v669
    %v695 = vmul.f32 %v18, %v670
    %v696 = vmul.f32 %v19, %v671
    %v697 = vmul.f32 %v20, %v672
    %v698 = vmul.f32 %v21, %v673
    %v699 = vmul.f32 %v22, %v674
    %v700 = vmul.f32 %v23, %v675
    %v701 = vmul.f32 %v24, %v676
    %v702 = vmul.f32 %v25, %v677
    %v703 = vmul.f32 %v26, %v678
    %v704 = vmul.f32 %v27, %v679
    %v705 = vmul.f32 %v28, %v680
    %v706 = vmul.f32 %v29, %v681
    %v707 = vmul.f32 %v30, %v682
    %v708 = vmul.f32 %v31, %v683
    %v709 = vmul.f32 %v32, %v684
    %v710 = vmul.f32 %v33, %v685
    %v711 = vmul.f32 %v34, %v686
    %v712 = vmul.f32 %v35, %v687
    %v713 = vmul.f32 %v36, %v688
    %v714 = vmul.f32 %v37, %v689
    %v715 = vmul.f32 %v38, %v690
    %v716 = vadd.f32 %v691, %v692
    %v717 = vadd.f32 %v716, %v693
    %v718 = vadd.f32 %v717, %v694
    %v719 = vsel %vm92, %v695, 0.0
    %v720 = vadd.f32 %v718, %v719
    %721 = vadd.xlane.f32.xlu0 %v720
    %v722 = vpop.xlane.xlu0 %721
    %v723 = vadd.f32 %v696, %v697
    %v724 = vadd.f32 %v723, %v698
    %v725 = vadd.f32 %v724, %v699
    %v726 = vsel %vm92, %v700, 0.0
    %v727 = vadd.f32 %v725, %v726
    %728 = vadd.xlane.f32.xlu0 %v727
    %v729 = vpop.xlane.xlu0 %728
    %v730 = vadd.f32 %v701, %v702
    %v731 = vadd.f32 %v730, %v703
    %v732 = vadd.f32 %v731, %v704
    %v733 = vsel %vm92, %v705, 0.0
    %v734 = vadd.f32 %v732, %v733
    %735 = vadd.xlane.f32.xlu0 %v734
    %v736 = vpop.xlane.xlu0 %735
    %v737 = vadd.f32 %v706, %v707
    %v738 = vadd.f32 %v737, %v708
    %v739 = vadd.f32 %v738, %v709
    %v740 = vsel %vm92, %v710, 0.0
    %v741 = vadd.f32 %v739, %v740
    %742 = vadd.xlane.f32.xlu0 %v741
    %v743 = vpop.xlane.xlu0 %742
    %v744 = vsel %vm118, %v711, 0.0
    %v745 = vsel %vm118, %v712, 0.0
    %v746 = vadd.f32 %v744, %v745
    %v747 = vsel %vm118, %v713, 0.0
    %v748 = vadd.f32 %v746, %v747
    %v749 = vsel %vm118, %v714, 0.0
    %v750 = vadd.f32 %v748, %v749
    %v751 = vsel %vm126, %v715, 0.0
    %v752 = vadd.f32 %v750, %v751
    %753 = vadd.xlane.f32.xlu0 %v752
    %v754 = vpop.xlane.xlu0 %753
    %v755 = vadd.f32 %v722, %v729
    %v756 = vadd.f32 %v755, %v736
    %v757 = vadd.f32 %v756, %v743
    %v758 = vsel %vm118, %v754, 0.0
    %v759 = vadd.f32 %v757, %v758
    %v760 = vrot.slane %v759, 4
    %v761 = vadd.f32 %v759, %v760
    %v762 = vrot.slane %v761, 2
    %v763 = vadd.f32 %v761, %v762
    %v764 = vrot.slane %v763, 1
    %v765 = vadd.f32 %v763, %v764
    %vm766 = vcmp.eq.s32.totalorder %v13, 6
    %v767 = vsel %vm766, %v765, 0.0
    %v768 = vadd.f32 %v664, %v767
    %s769 = scalar_lea.vmem %s1, 1400
    %v770 = vld [vmem:[%s769] sm:$0xff]
    %v771 = vld [vmem:[%s769 + $0x8] sm:$0xff]
    %v772 = vld [vmem:[%s769 + $0x10] sm:$0xff]
    %v773 = vld [vmem:[%s769 + $0x18] sm:$0xff]
    %v774 = vld [vmem:[%s769 + $0x20] sm:$0xff]
    %v775 = vld [vmem:[%s769 + $0x28] sm:$0xff]
    %v776 = vld [vmem:[%s769 + $0x30] sm:$0xff]
    %v777 = vld [vmem:[%s769 + $0x38] sm:$0xff]
    %v778 = vld [vmem:[%s769 + $0x40] sm:$0xff]
    %v779 = vld [vmem:[%s769 + $0x48] sm:$0xff]
    %v780 = vld [vmem:[%s769 + $0x50] sm:$0xff]
    %v781 = vld [vmem:[%s769 + $0x58] sm:$0xff]
    %v782 = vld [vmem:[%s769 + $0x60] sm:$0xff]
    %v783 = vld [vmem:[%s769 + $0x68] sm:$0xff]
    %v784 = vld [vmem:[%s769 + $0x70] sm:$0xff]
    %v785 = vld [vmem:[%s769 + $0x78] sm:$0xff]
    %v786 = vld [vmem:[%s769 + $0x80] sm:$0xff]
    %v787 = vld [vmem:[%s769 + $0x88] sm:$0xff]
    %v788 = vld [vmem:[%s769 + $0x90] sm:$0xff]
    %v789 = vld [vmem:[%s769 + $0x98] sm:$0xff]
    %v790 = vld [vmem:[%s769 + $0xa0] sm:$0xf]
    %v791 = vld [vmem:[%s769 + $0xa8] sm:$0xf]
    %v792 = vld [vmem:[%s769 + $0xb0] sm:$0xf]
    %v793 = vld [vmem:[%s769 + $0xb8] sm:$0xf]
    %v794 = vld [vmem:[%s769 + $0xc0] sm:$0xf]
    %v795 = vmul.f32 %v14, %v770
    %v796 = vmul.f32 %v15, %v771
    %v797 = vmul.f32 %v16, %v772
    %v798 = vmul.f32 %v17, %v773
    %v799 = vmul.f32 %v18, %v774
    %v800 = vmul.f32 %v19, %v775
    %v801 = vmul.f32 %v20, %v776
    %v802 = vmul.f32 %v21, %v777
    %v803 = vmul.f32 %v22, %v778
    %v804 = vmul.f32 %v23, %v779
    %v805 = vmul.f32 %v24, %v780
    %v806 = vmul.f32 %v25, %v781
    %v807 = vmul.f32 %v26, %v782
    %v808 = vmul.f32 %v27, %v783
    %v809 = vmul.f32 %v28, %v784
    %v810 = vmul.f32 %v29, %v785
    %v811 = vmul.f32 %v30, %v786
    %v812 = vmul.f32 %v31, %v787
    %v813 = vmul.f32 %v32, %v788
    %v814 = vmul.f32 %v33, %v789
    %v815 = vmul.f32 %v34, %v790
    %v816 = vmul.f32 %v35, %v791
    %v817 = vmul.f32 %v36, %v792
    %v818 = vmul.f32 %v37, %v793
    %v819 = vmul.f32 %v38, %v794
    %v820 = vadd.f32 %v795, %v796
    %v821 = vadd.f32 %v820, %v797
    %v822 = vadd.f32 %v821, %v798
    %v823 = vsel %vm92, %v799, 0.0
    %v824 = vadd.f32 %v822, %v823
    %825 = vadd.xlane.f32.xlu0 %v824
    %v826 = vpop.xlane.xlu0 %825
    %v827 = vadd.f32 %v800, %v801
    %v828 = vadd.f32 %v827, %v802
    %v829 = vadd.f32 %v828, %v803
    %v830 = vsel %vm92, %v804, 0.0
    %v831 = vadd.f32 %v829, %v830
    %832 = vadd.xlane.f32.xlu0 %v831
    %v833 = vpop.xlane.xlu0 %832
    %v834 = vadd.f32 %v805, %v806
    %v835 = vadd.f32 %v834, %v807
    %v836 = vadd.f32 %v835, %v808
    %v837 = vsel %vm92, %v809, 0.0
    %v838 = vadd.f32 %v836, %v837
    %839 = vadd.xlane.f32.xlu0 %v838
    %v840 = vpop.xlane.xlu0 %839
    %v841 = vadd.f32 %v810, %v811
    %v842 = vadd.f32 %v841, %v812
    %v843 = vadd.f32 %v842, %v813
    %v844 = vsel %vm92, %v814, 0.0
    %v845 = vadd.f32 %v843, %v844
    %846 = vadd.xlane.f32.xlu0 %v845
    %v847 = vpop.xlane.xlu0 %846
    %v848 = vsel %vm118, %v815, 0.0
    %v849 = vsel %vm118, %v816, 0.0
    %v850 = vadd.f32 %v848, %v849
    %v851 = vsel %vm118, %v817, 0.0
    %v852 = vadd.f32 %v850, %v851
    %v853 = vsel %vm118, %v818, 0.0
    %v854 = vadd.f32 %v852, %v853
    %v855 = vsel %vm126, %v819, 0.0
    %v856 = vadd.f32 %v854, %v855
    %857 = vadd.xlane.f32.xlu0 %v856
    %v858 = vpop.xlane.xlu0 %857
    %v859 = vadd.f32 %v826, %v833
    %v860 = vadd.f32 %v859, %v840
    %v861 = vadd.f32 %v860, %v847
    %v862 = vsel %vm118, %v858, 0.0
    %v863 = vadd.f32 %v861, %v862
    %v864 = vrot.slane %v863, 4
    %v865 = vadd.f32 %v863, %v864
    %v866 = vrot.slane %v865, 2
    %v867 = vadd.f32 %v865, %v866
    %v868 = vrot.slane %v867, 1
    %v869 = vadd.f32 %v867, %v868
    %vm870 = vcmp.eq.s32.totalorder %v13, 7
    %v871 = vsel %vm870, %v869, 0.0
    %v872 = vadd.f32 %v768, %v871
    %s873 = scalar_lea.vmem %s1, 1600
    %v874 = vld [vmem:[%s873] sm:$0xff]
    %v875 = vld [vmem:[%s873 + $0x8] sm:$0xff]
    %v876 = vld [vmem:[%s873 + $0x10] sm:$0xff]
    %v877 = vld [vmem:[%s873 + $0x18] sm:$0xff]
    %v878 = vld [vmem:[%s873 + $0x20] sm:$0xff]
    %v879 = vld [vmem:[%s873 + $0x28] sm:$0xff]
    %v880 = vld [vmem:[%s873 + $0x30] sm:$0xff]
    %v881 = vld [vmem:[%s873 + $0x38] sm:$0xff]
    %v882 = vld [vmem:[%s873 + $0x40] sm:$0xff]
    %v883 = vld [vmem:[%s873 + $0x48] sm:$0xff]
    %v884 = vld [vmem:[%s873 + $0x50] sm:$0xff]
    %v885 = vld [vmem:[%s873 + $0x58] sm:$0xff]
    %v886 = vld [vmem:[%s873 + $0x60] sm:$0xff]
    %v887 = vld [vmem:[%s873 + $0x68] sm:$0xff]
    %v888 = vld [vmem:[%s873 + $0x70] sm:$0xff]
    %v889 = vld [vmem:[%s873 + $0x78] sm:$0xff]
    %v890 = vld [vmem:[%s873 + $0x80] sm:$0xff]
    %v891 = vld [vmem:[%s873 + $0x88] sm:$0xff]
    %v892 = vld [vmem:[%s873 + $0x90] sm:$0xff]
    %v893 = vld [vmem:[%s873 + $0x98] sm:$0xff]
    %v894 = vld [vmem:[%s873 + $0xa0] sm:$0xf]
    %v895 = vld [vmem:[%s873 + $0xa8] sm:$0xf]
    %v896 = vld [vmem:[%s873 + $0xb0] sm:$0xf]
    %v897 = vld [vmem:[%s873 + $0xb8] sm:$0xf]
    %v898 = vld [vmem:[%s873 + $0xc0] sm:$0xf]
    %v899 = vmul.f32 %v14, %v874
    %v900 = vmul.f32 %v15, %v875
    %v901 = vmul.f32 %v16, %v876
    %v902 = vmul.f32 %v17, %v877
    %v903 = vmul.f32 %v18, %v878
    %v904 = vmul.f32 %v19, %v879
    %v905 = vmul.f32 %v20, %v880
    %v906 = vmul.f32 %v21, %v881
    %v907 = vmul.f32 %v22, %v882
    %v908 = vmul.f32 %v23, %v883
    %v909 = vmul.f32 %v24, %v884
    %v910 = vmul.f32 %v25, %v885
    %v911 = vmul.f32 %v26, %v886
    %v912 = vmul.f32 %v27, %v887
    %v913 = vmul.f32 %v28, %v888
    %v914 = vmul.f32 %v29, %v889
    %v915 = vmul.f32 %v30, %v890
    %v916 = vmul.f32 %v31, %v891
    %v917 = vmul.f32 %v32, %v892
    %v918 = vmul.f32 %v33, %v893
    %v919 = vmul.f32 %v34, %v894
    %v920 = vmul.f32 %v35, %v895
    %v921 = vmul.f32 %v36, %v896
    %v922 = vmul.f32 %v37, %v897
    %v923 = vmul.f32 %v38, %v898
    %v924 = vadd.f32 %v899, %v900
    %v925 = vadd.f32 %v924, %v901
    %v926 = vadd.f32 %v925, %v902
    %v927 = vsel %vm92, %v903, 0.0
    %v928 = vadd.f32 %v926, %v927
    %929 = vadd.xlane.f32.xlu0 %v928
    %v930 = vpop.xlane.xlu0 %929
    %v931 = vadd.f32 %v904, %v905
    %v932 = vadd.f32 %v931, %v906
    %v933 = vadd.f32 %v932, %v907
    %v934 = vsel %vm92, %v908, 0.0
    %v935 = vadd.f32 %v933, %v934
    %936 = vadd.xlane.f32.xlu0 %v935
    %v937 = vpop.xlane.xlu0 %936
    %v938 = vadd.f32 %v909, %v910
    %v939 = vadd.f32 %v938, %v911
    %v940 = vadd.f32 %v939, %v912
    %v941 = vsel %vm92, %v913, 0.0
    %v942 = vadd.f32 %v940, %v941
    %943 = vadd.xlane.f32.xlu0 %v942
    %v944 = vpop.xlane.xlu0 %943
    %v945 = vadd.f32 %v914, %v915
    %v946 = vadd.f32 %v945, %v916
    %v947 = vadd.f32 %v946, %v917
    %v948 = vsel %vm92, %v918, 0.0
    %v949 = vadd.f32 %v947, %v948
    %950 = vadd.xlane.f32.xlu0 %v949
    %v951 = vpop.xlane.xlu0 %950
    %v952 = vsel %vm118, %v919, 0.0
    %v953 = vsel %vm118, %v920, 0.0
    %v954 = vadd.f32 %v952, %v953
    %v955 = vsel %vm118, %v921, 0.0
    %v956 = vadd.f32 %v954, %v955
    %v957 = vsel %vm118, %v922, 0.0
    %v958 = vadd.f32 %v956, %v957
    %v959 = vsel %vm126, %v923, 0.0
    %v960 = vadd.f32 %v958, %v959
    %961 = vadd.xlane.f32.xlu0 %v960
    %v962 = vpop.xlane.xlu0 %961
    %v963 = vadd.f32 %v930, %v937
    %v964 = vadd.f32 %v963, %v944
    %v965 = vadd.f32 %v964, %v951
    %v966 = vsel %vm118, %v962, 0.0
    %v967 = vadd.f32 %v965, %v966
    %v968 = vrot.slane %v967, 4
    %v969 = vadd.f32 %v967, %v968
    %v970 = vrot.slane %v969, 2
    %v971 = vadd.f32 %v969, %v970
    %v972 = vrot.slane %v971, 1
    %v973 = vadd.f32 %v971, %v972
    %vm974 = vcmp.eq.s32.totalorder %v13, 8
    %v975 = vsel %vm974, %v973, 0.0
    %v976 = vadd.f32 %v872, %v975
    %s977 = scalar_lea.vmem %s1, 1800
    %v978 = vld [vmem:[%s977] sm:$0xff]
    %v979 = vld [vmem:[%s977 + $0x8] sm:$0xff]
    %v980 = vld [vmem:[%s977 + $0x10] sm:$0xff]
    %v981 = vld [vmem:[%s977 + $0x18] sm:$0xff]
    %v982 = vld [vmem:[%s977 + $0x20] sm:$0xff]
    %v983 = vld [vmem:[%s977 + $0x28] sm:$0xff]
    %v984 = vld [vmem:[%s977 + $0x30] sm:$0xff]
    %v985 = vld [vmem:[%s977 + $0x38] sm:$0xff]
    %v986 = vld [vmem:[%s977 + $0x40] sm:$0xff]
    %v987 = vld [vmem:[%s977 + $0x48] sm:$0xff]
    %v988 = vld [vmem:[%s977 + $0x50] sm:$0xff]
    %v989 = vld [vmem:[%s977 + $0x58] sm:$0xff]
    %v990 = vld [vmem:[%s977 + $0x60] sm:$0xff]
    %v991 = vld [vmem:[%s977 + $0x68] sm:$0xff]
    %v992 = vld [vmem:[%s977 + $0x70] sm:$0xff]
    %v993 = vld [vmem:[%s977 + $0x78] sm:$0xff]
    %v994 = vld [vmem:[%s977 + $0x80] sm:$0xff]
    %v995 = vld [vmem:[%s977 + $0x88] sm:$0xff]
    %v996 = vld [vmem:[%s977 + $0x90] sm:$0xff]
    %v997 = vld [vmem:[%s977 + $0x98] sm:$0xff]
    %v998 = vld [vmem:[%s977 + $0xa0] sm:$0xf]
    %v999 = vld [vmem:[%s977 + $0xa8] sm:$0xf]
    %v1000 = vld [vmem:[%s977 + $0xb0] sm:$0xf]
    %v1001 = vld [vmem:[%s977 + $0xb8] sm:$0xf]
    %v1002 = vld [vmem:[%s977 + $0xc0] sm:$0xf]
    %v1003 = vmul.f32 %v14, %v978
    %v1004 = vmul.f32 %v15, %v979
    %v1005 = vmul.f32 %v16, %v980
    %v1006 = vmul.f32 %v17, %v981
    %v1007 = vmul.f32 %v18, %v982
    %v1008 = vmul.f32 %v19, %v983
    %v1009 = vmul.f32 %v20, %v984
    %v1010 = vmul.f32 %v21, %v985
    %v1011 = vmul.f32 %v22, %v986
    %v1012 = vmul.f32 %v23, %v987
    %v1013 = vmul.f32 %v24, %v988
    %v1014 = vmul.f32 %v25, %v989
    %v1015 = vmul.f32 %v26, %v990
    %v1016 = vmul.f32 %v27, %v991
    %v1017 = vmul.f32 %v28, %v992
    %v1018 = vmul.f32 %v29, %v993
    %v1019 = vmul.f32 %v30, %v994
    %v1020 = vmul.f32 %v31, %v995
    %v1021 = vmul.f32 %v32, %v996
    %v1022 = vmul.f32 %v33, %v997
    %v1023 = vmul.f32 %v34, %v998
    %v1024 = vmul.f32 %v35, %v999
    %v1025 = vmul.f32 %v36, %v1000
    %v1026 = vmul.f32 %v37, %v1001
    %v1027 = vmul.f32 %v38, %v1002
    %v1028 = vadd.f32 %v1003, %v1004
    %v1029 = vadd.f32 %v1028, %v1005
    %v1030 = vadd.f32 %v1029, %v1006
    %v1031 = vsel %vm92, %v1007, 0.0
    %v1032 = vadd.f32 %v1030, %v1031
    %1033 = vadd.xlane.f32.xlu0 %v1032
    %v1034 = vpop.xlane.xlu0 %1033
    %v1035 = vadd.f32 %v1008, %v1009
    %v1036 = vadd.f32 %v1035, %v1010
    %v1037 = vadd.f32 %v1036, %v1011
    %v1038 = vsel %vm92, %v1012, 0.0
    %v1039 = vadd.f32 %v1037, %v1038
    %1040 = vadd.xlane.f32.xlu0 %v1039
    %v1041 = vpop.xlane.xlu0 %1040
    %v1042 = vadd.f32 %v1013, %v1014
    %v1043 = vadd.f32 %v1042, %v1015
    %v1044 = vadd.f32 %v1043, %v1016
    %v1045 = vsel %vm92, %v1017, 0.0
    %v1046 = vadd.f32 %v1044, %v1045
    %1047 = vadd.xlane.f32.xlu0 %v1046
    %v1048 = vpop.xlane.xlu0 %1047
    %v1049 = vadd.f32 %v1018, %v1019
    %v1050 = vadd.f32 %v1049, %v1020
    %v1051 = vadd.f32 %v1050, %v1021
    %v1052 = vsel %vm92, %v1022, 0.0
    %v1053 = vadd.f32 %v1051, %v1052
    %1054 = vadd.xlane.f32.xlu0 %v1053
    %v1055 = vpop.xlane.xlu0 %1054
    %v1056 = vsel %vm118, %v1023, 0.0
    %v1057 = vsel %vm118, %v1024, 0.0
    %v1058 = vadd.f32 %v1056, %v1057
    %v1059 = vsel %vm118, %v1025, 0.0
    %v1060 = vadd.f32 %v1058, %v1059
    %v1061 = vsel %vm118, %v1026, 0.0
    %v1062 = vadd.f32 %v1060, %v1061
    %v1063 = vsel %vm126, %v1027, 0.0
    %v1064 = vadd.f32 %v1062, %v1063
    %1065 = vadd.xlane.f32.xlu0 %v1064
    %v1066 = vpop.xlane.xlu0 %1065
    %v1067 = vadd.f32 %v1034, %v1041
    %v1068 = vadd.f32 %v1067, %v1048
    %v1069 = vadd.f32 %v1068, %v1055
    %v1070 = vsel %vm118, %v1066, 0.0
    %v1071 = vadd.f32 %v1069, %v1070
    %v1072 = vrot.slane %v1071, 4
    %v1073 = vadd.f32 %v1071, %v1072
    %v1074 = vrot.slane %v1073, 2
    %v1075 = vadd.f32 %v1073, %v1074
    %v1076 = vrot.slane %v1075, 1
    %v1077 = vadd.f32 %v1075, %v1076
    %vm1078 = vcmp.eq.s32.totalorder %v13, 9
    %v1079 = vsel %vm1078, %v1077, 0.0
    %v1080 = vadd.f32 %v976, %v1079
    %vm1081 = vcmask 80896
    %v1082 = vsel %vm1081, %v1080, -inf
    %1083 = vmax.xlane.f32.xlu0 %v1082
    %v1084 = vpop.xlane.xlu0 %1083
    %v1085 = vsub.f32 %v1080, %v1084
    %v1086 = vmul.f32 %v1085, 1.442695
    %v1087 = vpow.pop %v1086
    %v1088 = vsel %vm1081, %v1087, 0.0
    %1089 = vadd.xlane.f32.xlu0 %v1088
    %v1090 = vpop.xlane.xlu0 %1089
    %v1091 = vlog2.pop %v1090
    %v1092 = vmul.f32 %v1091, 0.6931472
    %v1093 = vsub.f32 %v1085, %v1092
    %vm1094 = vcmask 73728
    %1095 = vst.msk [vmem:[#allocation2] sm:$0x1] %vm1094, %v1093
    %s1096 = scalar_lea.vmem %s0, 200
    %v1097 = vld [vmem:[%s1096] sm:$0xff]
    %v1098 = vld [vmem:[%s1096 + $0x8] sm:$0xff]
    %v1099 = vld [vmem:[%s1096 + $0x10] sm:$0xff]
    %v1100 = vld [vmem:[%s1096 + $0x18] sm:$0xff]
    %v1101 = vld [vmem:[%s1096 + $0x20] sm:$0xff]
    %v1102 = vld [vmem:[%s1096 + $0x28] sm:$0xff]
    %v1103 = vld [vmem:[%s1096 + $0x30] sm:$0xff]
    %v1104 = vld [vmem:[%s1096 + $0x38] sm:$0xff]
    %v1105 = vld [vmem:[%s1096 + $0x40] sm:$0xff]
    %v1106 = vld [vmem:[%s1096 + $0x48] sm:$0xff]
    %v1107 = vld [vmem:[%s1096 + $0x50] sm:$0xff]
    %v1108 = vld [vmem:[%s1096 + $0x58] sm:$0xff]
    %v1109 = vld [vmem:[%s1096 + $0x60] sm:$0xff]
    %v1110 = vld [vmem:[%s1096 + $0x68] sm:$0xff]
    %v1111 = vld [vmem:[%s1096 + $0x70] sm:$0xff]
    %v1112 = vld [vmem:[%s1096 + $0x78] sm:$0xff]
    %v1113 = vld [vmem:[%s1096 + $0x80] sm:$0xff]
    %v1114 = vld [vmem:[%s1096 + $0x88] sm:$0xff]
    %v1115 = vld [vmem:[%s1096 + $0x90] sm:$0xff]
    %v1116 = vld [vmem:[%s1096 + $0x98] sm:$0xff]
    %v1117 = vld [vmem:[%s1096 + $0xa0] sm:$0xf]
    %v1118 = vld [vmem:[%s1096 + $0xa8] sm:$0xf]
    %v1119 = vld [vmem:[%s1096 + $0xb0] sm:$0xf]
    %v1120 = vld [vmem:[%s1096 + $0xb8] sm:$0xf]
    %v1121 = vld [vmem:[%s1096 + $0xc0] sm:$0xf]
    %v1122 = vld [vmem:[%s1] sm:$0xff]
    %v1123 = vld [vmem:[%s1 + $0x8] sm:$0xff]
    %v1124 = vld [vmem:[%s1 + $0x10] sm:$0xff]
    %v1125 = vld [vmem:[%s1 + $0x18] sm:$0xff]
    %v1126 = vld [vmem:[%s1 + $0x20] sm:$0xff]
    %v1127 = vld [vmem:[%s1 + $0x28] sm:$0xff]
    %v1128 = vld [vmem:[%s1 + $0x30] sm:$0xff]
    %v1129 = vld [vmem:[%s1 + $0x38] sm:$0xff]
    %v1130 = vld [vmem:[%s1 + $0x40] sm:$0xff]
    %v1131 = vld [vmem:[%s1 + $0x48] sm:$0xff]
    %v1132 = vld [vmem:[%s1 + $0x50] sm:$0xff]
    %v1133 = vld [vmem:[%s1 + $0x58] sm:$0xff]
    %v1134 = vld [vmem:[%s1 + $0x60] sm:$0xff]
    %v1135 = vld [vmem:[%s1 + $0x68] sm:$0xff]
    %v1136 = vld [vmem:[%s1 + $0x70] sm:$0xff]
    %v1137 = vld [vmem:[%s1 + $0x78] sm:$0xff]
    %v1138 = vld [vmem:[%s1 + $0x80] sm:$0xff]
    %v1139 = vld [vmem:[%s1 + $0x88] sm:$0xff]
    %v1140 = vld [vmem:[%s1 + $0x90] sm:$0xff]
    %v1141 = vld [vmem:[%s1 + $0x98] sm:$0xff]
    %v1142 = vld [vmem:[%s1 + $0xa0] sm:$0xf]
    %v1143 = vld [vmem:[%s1 + $0xa8] sm:$0xf]
    %v1144 = vld [vmem:[%s1 + $0xb0] sm:$0xf]
    %v1145 = vld [vmem:[%s1 + $0xb8] sm:$0xf]
    %v1146 = vld [vmem:[%s1 + $0xc0] sm:$0xf]
    %v1147 = vmul.f32 %v1097, %v1122
    %v1148 = vmul.f32 %v1098, %v1123
    %v1149 = vmul.f32 %v1099, %v1124
    %v1150 = vmul.f32 %v1100, %v1125
    %v1151 = vmul.f32 %v1101, %v1126
    %v1152 = vmul.f32 %v1102, %v1127
    %v1153 = vmul.f32 %v1103, %v1128
    %v1154 = vmul.f32 %v1104, %v1129
    %v1155 = vmul.f32 %v1105, %v1130
    %v1156 = vmul.f32 %v1106, %v1131
    %v1157 = vmul.f32 %v1107, %v1132
    %v1158 = vmul.f32 %v1108, %v1133
    %v1159 = vmul.f32 %v1109, %v1134
    %v1160 = vmul.f32 %v1110, %v1135
    %v1161 = vmul.f32 %v1111, %v1136
    %v1162 = vmul.f32 %v1112, %v1137
    %v1163 = vmul.f32 %v1113, %v1138
    %v1164 = vmul.f32 %v1114, %v1139
    %v1165 = vmul.f32 %v1115, %v1140
    %v1166 = vmul.f32 %v1116, %v1141
    %v1167 = vmul.f32 %v1117, %v1142
    %v1168 = vmul.f32 %v1118, %v1143
    %v1169 = vmul.f32 %v1119, %v1144
    %v1170 = vmul.f32 %v1120, %v1145
    %v1171 = vmul.f32 %v1121, %v1146
    %v1172 = vadd.f32 %v1147, %v1148
    %v1173 = vadd.f32 %v1172, %v1149
    %v1174 = vadd.f32 %v1173, %v1150
    %v1175 = vsel %vm92, %v1151, 0.0
    %v1176 = vadd.f32 %v1174, %v1175
    %1177 = vadd.xlane.f32.xlu0 %v1176
    %v1178 = vpop.xlane.xlu0 %1177
    %v1179 = vadd.f32 %v1152, %v1153
    %v1180 = vadd.f32 %v1179, %v1154
    %v1181 = vadd.f32 %v1180, %v1155
    %v1182 = vsel %vm92, %v1156, 0.0
    %v1183 = vadd.f32 %v1181, %v1182
    %1184 = vadd.xlane.f32.xlu0 %v1183
    %v1185 = vpop.xlane.xlu0 %1184
    %v1186 = vadd.f32 %v1157, %v1158
    %v1187 = vadd.f32 %v1186, %v1159
    %v1188 = vadd.f32 %v1187, %v1160
    %v1189 = vsel %vm92, %v1161, 0.0
    %v1190 = vadd.f32 %v1188, %v1189
    %1191 = vadd.xlane.f32.xlu0 %v1190
    %v1192 = vpop.xlane.xlu0 %1191
    %v1193 = vadd.f32 %v1162, %v1163
    %v1194 = vadd.f32 %v1193, %v1164
    %v1195 = vadd.f32 %v1194, %v1165
    %v1196 = vsel %vm92, %v1166, 0.0
    %v1197 = vadd.f32 %v1195, %v1196
    %1198 = vadd.xlane.f32.xlu0 %v1197
    %v1199 = vpop.xlane.xlu0 %1198
    %v1200 = vsel %vm118, %v1167, 0.0
    %v1201 = vsel %vm118, %v1168, 0.0
    %v1202 = vadd.f32 %v1200, %v1201
    %v1203 = vsel %vm118, %v1169, 0.0
    %v1204 = vadd.f32 %v1202, %v1203
    %v1205 = vsel %vm118, %v1170, 0.0
    %v1206 = vadd.f32 %v1204, %v1205
    %v1207 = vsel %vm126, %v1171, 0.0
    %v1208 = vadd.f32 %v1206, %v1207
    %1209 = vadd.xlane.f32.xlu0 %v1208
    %v1210 = vpop.xlane.xlu0 %1209
    %v1211 = vadd.f32 %v1178, %v1185
    %v1212 = vadd.f32 %v1211, %v1192
    %v1213 = vadd.f32 %v1212, %v1199
    %v1214 = vsel %vm118, %v1210, 0.0
    %v1215 = vadd.f32 %v1213, %v1214
    %v1216 = vrot.slane %v1215, 4
    %v1217 = vadd.f32 %v1215, %v1216
    %v1218 = vrot.slane %v1217, 2
    %v1219 = vadd.f32 %v1217, %v1218
    %v1220 = vrot.slane %v1219, 1
    %v1221 = vadd.f32 %v1219, %v1220
    %v1222 = vsel %vm142, %v1221, 0.0
    %v1223 = vadd.f32 %v1222, 0.0
    %v1224 = vld [vmem:[%s145] sm:$0xff]
    %v1225 = vld [vmem:[%s145 + $0x8] sm:$0xff]
    %v1226 = vld [vmem:[%s145 + $0x10] sm:$0xff]
    %v1227 = vld [vmem:[%s145 + $0x18] sm:$0xff]
    %v1228 = vld [vmem:[%s145 + $0x20] sm:$0xff]
    %v1229 = vld [vmem:[%s145 + $0x28] sm:$0xff]
    %v1230 = vld [vmem:[%s145 + $0x30] sm:$0xff]
    %v1231 = vld [vmem:[%s145 + $0x38] sm:$0xff]
    %v1232 = vld [vmem:[%s145 + $0x40] sm:$0xff]
    %v1233 = vld [vmem:[%s145 + $0x48] sm:$0xff]
    %v1234 = vld [vmem:[%s145 + $0x50] sm:$0xff]
    %v1235 = vld [vmem:[%s145 + $0x58] sm:$0xff]
    %v1236 = vld [vmem:[%s145 + $0x60] sm:$0xff]
    %v1237 = vld [vmem:[%s145 + $0x68] sm:$0xff]
    %v1238 = vld [vmem:[%s145 + $0x70] sm:$0xff]
    %v1239 = vld [vmem:[%s145 + $0x78] sm:$0xff]
    %v1240 = vld [vmem:[%s145 + $0x80] sm:$0xff]
    %v1241 = vld [vmem:[%s145 + $0x88] sm:$0xff]
    %v1242 = vld [vmem:[%s145 + $0x90] sm:$0xff]
    %v1243 = vld [vmem:[%s145 + $0x98] sm:$0xff]
    %v1244 = vld [vmem:[%s145 + $0xa0] sm:$0xf]
    %v1245 = vld [vmem:[%s145 + $0xa8] sm:$0xf]
    %v1246 = vld [vmem:[%s145 + $0xb0] sm:$0xf]
    %v1247 = vld [vmem:[%s145 + $0xb8] sm:$0xf]
    %v1248 = vld [vmem:[%s145 + $0xc0] sm:$0xf]
    %v1249 = vmul.f32 %v1097, %v1224
    %v1250 = vmul.f32 %v1098, %v1225
    %v1251 = vmul.f32 %v1099, %v1226
    %v1252 = vmul.f32 %v1100, %v1227
    %v1253 = vmul.f32 %v1101, %v1228
    %v1254 = vmul.f32 %v1102, %v1229
    %v1255 = vmul.f32 %v1103, %v1230
    %v1256 = vmul.f32 %v1104, %v1231
    %v1257 = vmul.f32 %v1105, %v1232
    %v1258 = vmul.f32 %v1106, %v1233
    %v1259 = vmul.f32 %v1107, %v1234
    %v1260 = vmul.f32 %v1108, %v1235
    %v1261 = vmul.f32 %v1109, %v1236
    %v1262 = vmul.f32 %v1110, %v1237
    %v1263 = vmul.f32 %v1111, %v1238
    %v1264 = vmul.f32 %v1112, %v1239
    %v1265 = vmul.f32 %v1113, %v1240
    %v1266 = vmul.f32 %v1114, %v1241
    %v1267 = vmul.f32 %v1115, %v1242
    %v1268 = vmul.f32 %v1116, %v1243
    %v1269 = vmul.f32 %v1117, %v1244
    %v1270 = vmul.f32 %v1118, %v1245
    %v1271 = vmul.f32 %v1119, %v1246
    %v1272 = vmul.f32 %v1120, %v1247
    %v1273 = vmul.f32 %v1121, %v1248
    %v1274 = vadd.f32 %v1249, %v1250
    %v1275 = vadd.f32 %v1274, %v1251
    %v1276 = vadd.f32 %v1275, %v1252
    %v1277 = vsel %vm92, %v1253, 0.0
    %v1278 = vadd.f32 %v1276, %v1277
    %1279 = vadd.xlane.f32.xlu0 %v1278
    %v1280 = vpop.xlane.xlu0 %1279
    %v1281 = vadd.f32 %v1254, %v1255
    %v1282 = vadd.f32 %v1281, %v1256
    %v1283 = vadd.f32 %v1282, %v1257
    %v1284 = vsel %vm92, %v1258, 0.0
    %v1285 = vadd.f32 %v1283, %v1284
    %1286 = vadd.xlane.f32.xlu0 %v1285
    %v1287 = vpop.xlane.xlu0 %1286
    %v1288 = vadd.f32 %v1259, %v1260
    %v1289 = vadd.f32 %v1288, %v1261
    %v1290 = vadd.f32 %v1289, %v1262
    %v1291 = vsel %vm92, %v1263, 0.0
    %v1292 = vadd.f32 %v1290, %v1291
    %1293 = vadd.xlane.f32.xlu0 %v1292
    %v1294 = vpop.xlane.xlu0 %1293
    %v1295 = vadd.f32 %v1264, %v1265
    %v1296 = vadd.f32 %v1295, %v1266
    %v1297 = vadd.f32 %v1296, %v1267
    %v1298 = vsel %vm92, %v1268, 0.0
    %v1299 = vadd.f32 %v1297, %v1298
    %1300 = vadd.xlane.f32.xlu0 %v1299
    %v1301 = vpop.xlane.xlu0 %1300
    %v1302 = vsel %vm118, %v1269, 0.0
    %v1303 = vsel %vm118, %v1270, 0.0
    %v1304 = vadd.f32 %v1302, %v1303
    %v1305 = vsel %vm118, %v1271, 0.0
    %v1306 = vadd.f32 %v1304, %v1305
    %v1307 = vsel %vm118, %v1272, 0.0
    %v1308 = vadd.f32 %v1306, %v1307
    %v1309 = vsel %vm126, %v1273, 0.0
    %v1310 = vadd.f32 %v1308, %v1309
    %1311 = vadd.xlane.f32.xlu0 %v1310
    %v1312 = vpop.xlane.xlu0 %1311
    %v1313 = vadd.f32 %v1280, %v1287
    %v1314 = vadd.f32 %v1313, %v1294
    %v1315 = vadd.f32 %v1314, %v1301
    %v1316 = vsel %vm118, %v1312, 0.0
    %v1317 = vadd.f32 %v1315, %v1316
    %v1318 = vrot.slane %v1317, 4
    %v1319 = vadd.f32 %v1317, %v1318
    %v1320 = vrot.slane %v1319, 2
    %v1321 = vadd.f32 %v1319, %v1320
    %v1322 = vrot.slane %v1321, 1
    %v1323 = vadd.f32 %v1321, %v1322
    %v1324 = vsel %vm246, %v1323, 0.0
    %v1325 = vadd.f32 %v1223, %v1324
    %v1326 = vld [vmem:[%s249] sm:$0xff]
    %v1327 = vld [vmem:[%s249 + $0x8] sm:$0xff]
    %v1328 = vld [vmem:[%s249 + $0x10] sm:$0xff]
    %v1329 = vld [vmem:[%s249 + $0x18] sm:$0xff]
    %v1330 = vld [vmem:[%s249 + $0x20] sm:$0xff]
    %v1331 = vld [vmem:[%s249 + $0x28] sm:$0xff]
    %v1332 = vld [vmem:[%s249 + $0x30] sm:$0xff]
    %v1333 = vld [vmem:[%s249 + $0x38] sm:$0xff]
    %v1334 = vld [vmem:[%s249 + $0x40] sm:$0xff]
    %v1335 = vld [vmem:[%s249 + $0x48] sm:$0xff]
    %v1336 = vld [vmem:[%s249 + $0x50] sm:$0xff]
    %v1337 = vld [vmem:[%s249 + $0x58] sm:$0xff]
    %v1338 = vld [vmem:[%s249 + $0x60] sm:$0xff]
    %v1339 = vld [vmem:[%s249 + $0x68] sm:$0xff]
    %v1340 = vld [vmem:[%s249 + $0x70] sm:$0xff]
    %v1341 = vld [vmem:[%s249 + $0x78] sm:$0xff]
    %v1342 = vld [vmem:[%s249 + $0x80] sm:$0xff]
    %v1343 = vld [vmem:[%s249 + $0x88] sm:$0xff]
    %v1344 = vld [vmem:[%s249 + $0x90] sm:$0xff]
    %v1345 = vld [vmem:[%s249 + $0x98] sm:$0xff]
    %v1346 = vld [vmem:[%s249 + $0xa0] sm:$0xf]
    %v1347 = vld [vmem:[%s249 + $0xa8] sm:$0xf]
    %v1348 = vld [vmem:[%s249 + $0xb0] sm:$0xf]
    %v1349 = vld [vmem:[%s249 + $0xb8] sm:$0xf]
    %v1350 = vld [vmem:[%s249 + $0xc0] sm:$0xf]
    %v1351 = vmul.f32 %v1097, %v1326
    %v1352 = vmul.f32 %v1098, %v1327
    %v1353 = vmul.f32 %v1099, %v1328
    %v1354 = vmul.f32 %v1100, %v1329
    %v1355 = vmul.f32 %v1101, %v1330
    %v1356 = vmul.f32 %v1102, %v1331
    %v1357 = vmul.f32 %v1103, %v1332
    %v1358 = vmul.f32 %v1104, %v1333
    %v1359 = vmul.f32 %v1105, %v1334
    %v1360 = vmul.f32 %v1106, %v1335
    %v1361 = vmul.f32 %v1107, %v1336
    %v1362 = vmul.f32 %v1108, %v1337
    %v1363 = vmul.f32 %v1109, %v1338
    %v1364 = vmul.f32 %v1110, %v1339
    %v1365 = vmul.f32 %v1111, %v1340
    %v1366 = vmul.f32 %v1112, %v1341
    %v1367 = vmul.f32 %v1113, %v1342
    %v1368 = vmul.f32 %v1114, %v1343
    %v1369 = vmul.f32 %v1115, %v1344
    %v1370 = vmul.f32 %v1116, %v1345
    %v1371 = vmul.f32 %v1117, %v1346
    %v1372 = vmul.f32 %v1118, %v1347
    %v1373 = vmul.f32 %v1119, %v1348
    %v1374 = vmul.f32 %v1120, %v1349
    %v1375 = vmul.f32 %v1121, %v1350
    %v1376 = vadd.f32 %v1351, %v1352
    %v1377 = vadd.f32 %v1376, %v1353
    %v1378 = vadd.f32 %v1377, %v1354
    %v1379 = vsel %vm92, %v1355, 0.0
    %v1380 = vadd.f32 %v1378, %v1379
    %1381 = vadd.xlane.f32.xlu0 %v1380
    %v1382 = vpop.xlane.xlu0 %1381
    %v1383 = vadd.f32 %v1356, %v1357
    %v1384 = vadd.f32 %v1383, %v1358
    %v1385 = vadd.f32 %v1384, %v1359
    %v1386 = vsel %vm92, %v1360, 0.0
    %v1387 = vadd.f32 %v1385, %v1386
    %1388 = vadd.xlane.f32.xlu0 %v1387
    %v1389 = vpop.xlane.xlu0 %1388
    %v1390 = vadd.f32 %v1361, %v1362
    %v1391 = vadd.f32 %v1390, %v1363
    %v1392 = vadd.f32 %v1391, %v1364
    %v1393 = vsel %vm92, %v1365, 0.0
    %v1394 = vadd.f32 %v1392, %v1393
    %1395 = vadd.xlane.f32.xlu0 %v1394
    %v1396 = vpop.xlane.xlu0 %1395
    %v1397 = vadd.f32 %v1366, %v1367
    %v1398 = vadd.f32 %v1397, %v1368
    %v1399 = vadd.f32 %v1398, %v1369
    %v1400 = vsel %vm92, %v1370, 0.0
    %v1401 = vadd.f32 %v1399, %v1400
    %1402 = vadd.xlane.f32.xlu0 %v1401
    %v1403 = vpop.xlane.xlu0 %1402
    %v1404 = vsel %vm118, %v1371, 0.0
    %v1405 = vsel %vm118, %v1372, 0.0
    %v1406 = vadd.f32 %v1404, %v1405
    %v1407 = vsel %vm118, %v1373, 0.0
    %v1408 = vadd.f32 %v1406, %v1407
    %v1409 = vsel %vm118, %v1374, 0.0
    %v1410 = vadd.f32 %v1408, %v1409
    %v1411 = vsel %vm126, %v1375, 0.0
    %v1412 = vadd.f32 %v1410, %v1411
    %1413 = vadd.xlane.f32.xlu0 %v1412
    %v1414 = vpop.xlane.xlu0 %1413
    %v1415 = vadd.f32 %v1382, %v1389
    %v1416 = vadd.f32 %v1415, %v1396
    %v1417 = vadd.f32 %v1416, %v1403
    %v1418 = vsel %vm118, %v1414, 0.0
    %v1419 = vadd.f32 %v1417, %v1418
    %v1420 = vrot.slane %v1419, 4
    %v1421 = vadd.f32 %v1419, %v1420
    %v1422 = vrot.slane %v1421, 2
    %v1423 = vadd.f32 %v1421, %v1422
    %v1424 = vrot.slane %v1423, 1
    %v1425 = vadd.f32 %v1423, %v1424
    %v1426 = vsel %vm350, %v1425, 0.0
    %v1427 = vadd.f32 %v1325, %v1426
    %v1428 = vld [vmem:[%s353] sm:$0xff]
    %v1429 = vld [vmem:[%s353 + $0x8] sm:$0xff]
    %v1430 = vld [vmem:[%s353 + $0x10] sm:$0xff]
    %v1431 = vld [vmem:[%s353 + $0x18] sm:$0xff]
    %v1432 = vld [vmem:[%s353 + $0x20] sm:$0xff]
    %v1433 = vld [vmem:[%s353 + $0x28] sm:$0xff]
    %v1434 = vld [vmem:[%s353 + $0x30] sm:$0xff]
    %v1435 = vld [vmem:[%s353 + $0x38] sm:$0xff]
    %v1436 = vld [vmem:[%s353 + $0x40] sm:$0xff]
    %v1437 = vld [vmem:[%s353 + $0x48] sm:$0xff]
    %v1438 = vld [vmem:[%s353 + $0x50] sm:$0xff]
    %v1439 = vld [vmem:[%s353 + $0x58] sm:$0xff]
    %v1440 = vld [vmem:[%s353 + $0x60] sm:$0xff]
    %v1441 = vld [vmem:[%s353 + $0x68] sm:$0xff]
    %v1442 = vld [vmem:[%s353 + $0x70] sm:$0xff]
    %v1443 = vld [vmem:[%s353 + $0x78] sm:$0xff]
    %v1444 = vld [vmem:[%s353 + $0x80] sm:$0xff]
    %v1445 = vld [vmem:[%s353 + $0x88] sm:$0xff]
    %v1446 = vld [vmem:[%s353 + $0x90] sm:$0xff]
    %v1447 = vld [vmem:[%s353 + $0x98] sm:$0xff]
    %v1448 = vld [vmem:[%s353 + $0xa0] sm:$0xf]
    %v1449 = vld [vmem:[%s353 + $0xa8] sm:$0xf]
    %v1450 = vld [vmem:[%s353 + $0xb0] sm:$0xf]
    %v1451 = vld [vmem:[%s353 + $0xb8] sm:$0xf]
    %v1452 = vld [vmem:[%s353 + $0xc0] sm:$0xf]
    %v1453 = vmul.f32 %v1097, %v1428
    %v1454 = vmul.f32 %v1098, %v1429
    %v1455 = vmul.f32 %v1099, %v1430
    %v1456 = vmul.f32 %v1100, %v1431
    %v1457 = vmul.f32 %v1101, %v1432
    %v1458 = vmul.f32 %v1102, %v1433
    %v1459 = vmul.f32 %v1103, %v1434
    %v1460 = vmul.f32 %v1104, %v1435
    %v1461 = vmul.f32 %v1105, %v1436
    %v1462 = vmul.f32 %v1106, %v1437
    %v1463 = vmul.f32 %v1107, %v1438
    %v1464 = vmul.f32 %v1108, %v1439
    %v1465 = vmul.f32 %v1109, %v1440
    %v1466 = vmul.f32 %v1110, %v1441
    %v1467 = vmul.f32 %v1111, %v1442
    %v1468 = vmul.f32 %v1112, %v1443
    %v1469 = vmul.f32 %v1113, %v1444
    %v1470 = vmul.f32 %v1114, %v1445
    %v1471 = vmul.f32 %v1115, %v1446
    %v1472 = vmul.f32 %v1116, %v1447
    %v1473 = vmul.f32 %v1117, %v1448
    %v1474 = vmul.f32 %v1118, %v1449
    %v1475 = vmul.f32 %v1119, %v1450
    %v1476 = vmul.f32 %v1120, %v1451
    %v1477 = vmul.f32 %v1121, %v1452
    %v1478 = vadd.f32 %v1453, %v1454
    %v1479 = vadd.f32 %v1478, %v1455
    %v1480 = vadd.f32 %v1479, %v1456
    %v1481 = vsel %vm92, %v1457, 0.0
    %v1482 = vadd.f32 %v1480, %v1481
    %1483 = vadd.xlane.f32.xlu0 %v1482
    %v1484 = vpop.xlane.xlu0 %1483
    %v1485 = vadd.f32 %v1458, %v1459
    %v1486 = vadd.f32 %v1485, %v1460
    %v1487 = vadd.f32 %v1486, %v1461
    %v1488 = vsel %vm92, %v1462, 0.0
    %v1489 = vadd.f32 %v1487, %v1488
    %1490 = vadd.xlane.f32.xlu0 %v1489
    %v1491 = vpop.xlane.xlu0 %1490
    %v1492 = vadd.f32 %v1463, %v1464
    %v1493 = vadd.f32 %v1492, %v1465
    %v1494 = vadd.f32 %v1493, %v1466
    %v1495 = vsel %vm92, %v1467, 0.0
    %v1496 = vadd.f32 %v1494, %v1495
    %1497 = vadd.xlane.f32.xlu0 %v1496
    %v1498 = vpop.xlane.xlu0 %1497
    %v1499 = vadd.f32 %v1468, %v1469
    %v1500 = vadd.f32 %v1499, %v1470
    %v1501 = vadd.f32 %v1500, %v1471
    %v1502 = vsel %vm92, %v1472, 0.0
    %v1503 = vadd.f32 %v1501, %v1502
    %1504 = vadd.xlane.f32.xlu0 %v1503
    %v1505 = vpop.xlane.xlu0 %1504
    %v1506 = vsel %vm118, %v1473, 0.0
    %v1507 = vsel %vm118, %v1474, 0.0
    %v1508 = vadd.f32 %v1506, %v1507
    %v1509 = vsel %vm118, %v1475, 0.0
    %v1510 = vadd.f32 %v1508, %v1509
    %v1511 = vsel %vm118, %v1476, 0.0
    %v1512 = vadd.f32 %v1510, %v1511
    %v1513 = vsel %vm126, %v1477, 0.0
    %v1514 = vadd.f32 %v1512, %v1513
    %1515 = vadd.xlane.f32.xlu0 %v1514
    %v1516 = vpop.xlane.xlu0 %1515
    %v1517 = vadd.f32 %v1484, %v1491
    %v1518 = vadd.f32 %v1517, %v1498
    %v1519 = vadd.f32 %v1518, %v1505
    %v1520 = vsel %vm118, %v1516, 0.0
    %v1521 = vadd.f32 %v1519, %v1520
    %v1522 = vrot.slane %v1521, 4
    %v1523 = vadd.f32 %v1521, %v1522
    %v1524 = vrot.slane %v1523, 2
    %v1525 = vadd.f32 %v1523, %v1524
    %v1526 = vrot.slane %v1525, 1
    %v1527 = vadd.f32 %v1525, %v1526
    %v1528 = vsel %vm454, %v1527, 0.0
    %v1529 = vadd.f32 %v1427, %v1528
    %v1530 = vld [vmem:[%s457] sm:$0xff]
    %v1531 = vld [vmem:[%s457 + $0x8] sm:$0xff]
    %v1532 = vld [vmem:[%s457 + $0x10] sm:$0xff]
    %v1533 = vld [vmem:[%s457 + $0x18] sm:$0xff]
    %v1534 = vld [vmem:[%s457 + $0x20] sm:$0xff]
    %v1535 = vld [vmem:[%s457 + $0x28] sm:$0xff]
    %v1536 = vld [vmem:[%s457 + $0x30] sm:$0xff]
    %v1537 = vld [vmem:[%s457 + $0x38] sm:$0xff]
    %v1538 = vld [vmem:[%s457 + $0x40] sm:$0xff]
    %v1539 = vld [vmem:[%s457 + $0x48] sm:$0xff]
    %v1540 = vld [vmem:[%s457 + $0x50] sm:$0xff]
    %v1541 = vld [vmem:[%s457 + $0x58] sm:$0xff]
    %v1542 = vld [vmem:[%s457 + $0x60] sm:$0xff]
    %v1543 = vld [vmem:[%s457 + $0x68] sm:$0xff]
    %v1544 = vld [vmem:[%s457 + $0x70] sm:$0xff]
    %v1545 = vld [vmem:[%s457 + $0x78] sm:$0xff]
    %v1546 = vld [vmem:[%s457 + $0x80] sm:$0xff]
    %v1547 = vld [vmem:[%s457 + $0x88] sm:$0xff]
    %v1548 = vld [vmem:[%s457 + $0x90] sm:$0xff]
    %v1549 = vld [vmem:[%s457 + $0x98] sm:$0xff]
    %v1550 = vld [vmem:[%s457 + $0xa0] sm:$0xf]
    %v1551 = vld [vmem:[%s457 + $0xa8] sm:$0xf]
    %v1552 = vld [vmem:[%s457 + $0xb0] sm:$0xf]
    %v1553 = vld [vmem:[%s457 + $0xb8] sm:$0xf]
    %v1554 = vld [vmem:[%s457 + $0xc0] sm:$0xf]
    %v1555 = vmul.f32 %v1097, %v1530
    %v1556 = vmul.f32 %v1098, %v1531
    %v1557 = vmul.f32 %v1099, %v1532
    %v1558 = vmul.f32 %v1100, %v1533
    %v1559 = vmul.f32 %v1101, %v1534
    %v1560 = vmul.f32 %v1102, %v1535
    %v1561 = vmul.f32 %v1103, %v1536
    %v1562 = vmul.f32 %v1104, %v1537
    %v1563 = vmul.f32 %v1105, %v1538
    %v1564 = vmul.f32 %v1106, %v1539
    %v1565 = vmul.f32 %v1107, %v1540
    %v1566 = vmul.f32 %v1108, %v1541
    %v1567 = vmul.f32 %v1109, %v1542
    %v1568 = vmul.f32 %v1110, %v1543
    %v1569 = vmul.f32 %v1111, %v1544
    %v1570 = vmul.f32 %v1112, %v1545
    %v1571 = vmul.f32 %v1113, %v1546
    %v1572 = vmul.f32 %v1114, %v1547
    %v1573 = vmul.f32 %v1115, %v1548
    %v1574 = vmul.f32 %v1116, %v1549
    %v1575 = vmul.f32 %v1117, %v1550
    %v1576 = vmul.f32 %v1118, %v1551
    %v1577 = vmul.f32 %v1119, %v1552
    %v1578 = vmul.f32 %v1120, %v1553
    %v1579 = vmul.f32 %v1121, %v1554
    %v1580 = vadd.f32 %v1555, %v1556
    %v1581 = vadd.f32 %v1580, %v1557
    %v1582 = vadd.f32 %v1581, %v1558
    %v1583 = vsel %vm92, %v1559, 0.0
    %v1584 = vadd.f32 %v1582, %v1583
    %1585 = vadd.xlane.f32.xlu0 %v1584
    %v1586 = vpop.xlane.xlu0 %1585
    %v1587 = vadd.f32 %v1560, %v1561
    %v1588 = vadd.f32 %v1587, %v1562
    %v1589 = vadd.f32 %v1588, %v1563
    %v1590 = vsel %vm92, %v1564, 0.0
    %v1591 = vadd.f32 %v1589, %v1590
    %1592 = vadd.xlane.f32.xlu0 %v1591
    %v1593 = vpop.xlane.xlu0 %1592
    %v1594 = vadd.f32 %v1565, %v1566
    %v1595 = vadd.f32 %v1594, %v1567
    %v1596 = vadd.f32 %v1595, %v1568
    %v1597 = vsel %vm92, %v1569, 0.0
    %v1598 = vadd.f32 %v1596, %v1597
    %1599 = vadd.xlane.f32.xlu0 %v1598
    %v1600 = vpop.xlane.xlu0 %1599
    %v1601 = vadd.f32 %v1570, %v1571
    %v1602 = vadd.f32 %v1601, %v1572
    %v1603 = vadd.f32 %v1602, %v1573
    %v1604 = vsel %vm92, %v1574, 0.0
    %v1605 = vadd.f32 %v1603, %v1604
    %1606 = vadd.xlane.f32.xlu0 %v1605
    %v1607 = vpop.xlane.xlu0 %1606
    %v1608 = vsel %vm118, %v1575, 0.0
    %v1609 = vsel %vm118, %v1576, 0.0
    %v1610 = vadd.f32 %v1608, %v1609
    %v1611 = vsel %vm118, %v1577, 0.0
    %v1612 = vadd.f32 %v1610, %v1611
    %v1613 = vsel %vm118, %v1578, 0.0
    %v1614 = vadd.f32 %v1612, %v1613
    %v1615 = vsel %vm126, %v1579, 0.0
    %v1616 = vadd.f32 %v1614, %v1615
    %1617 = vadd.xlane.f32.xlu0 %v1616
    %v1618 = vpop.xlane.xlu0 %1617
    %v1619 = vadd.f32 %v1586, %v1593
    %v1620 = vadd.f32 %v1619, %v1600
    %v1621 = vadd.f32 %v1620, %v1607
    %v1622 = vsel %vm118, %v1618, 0.0
    %v1623 = vadd.f32 %v1621, %v1622
    %v1624 = vrot.slane %v1623, 4
    %v1625 = vadd.f32 %v1623, %v1624
    %v1626 = vrot.slane %v1625, 2
    %v1627 = vadd.f32 %v1625, %v1626
    %v1628 = vrot.slane %v1627, 1
    %v1629 = vadd.f32 %v1627, %v1628
    %v1630 = vsel %vm558, %v1629, 0.0
    %v1631 = vadd.f32 %v1529, %v1630
    %v1632 = vld [vmem:[%s561] sm:$0xff]
    %v1633 = vld [vmem:[%s561 + $0x8] sm:$0xff]
    %v1634 = vld [vmem:[%s561 + $0x10] sm:$0xff]
    %v1635 = vld [vmem:[%s561 + $0x18] sm:$0xff]
    %v1636 = vld [vmem:[%s561 + $0x20] sm:$0xff]
    %v1637 = vld [vmem:[%s561 + $0x28] sm:$0xff]
    %v1638 = vld [vmem:[%s561 + $0x30] sm:$0xff]
    %v1639 = vld [vmem:[%s561 + $0x38] sm:$0xff]
    %v1640 = vld [vmem:[%s561 + $0x40] sm:$0xff]
    %v1641 = vld [vmem:[%s561 + $0x48] sm:$0xff]
    %v1642 = vld [vmem:[%s561 + $0x50] sm:$0xff]
    %v1643 = vld [vmem:[%s561 + $0x58] sm:$0xff]
    %v1644 = vld [vmem:[%s561 + $0x60] sm:$0xff]
    %v1645 = vld [vmem:[%s561 + $0x68] sm:$0xff]
    %v1646 = vld [vmem:[%s561 + $0x70] sm:$0xff]
    %v1647 = vld [vmem:[%s561 + $0x78] sm:$0xff]
    %v1648 = vld [vmem:[%s561 + $0x80] sm:$0xff]
    %v1649 = vld [vmem:[%s561 + $0x88] sm:$0xff]
    %v1650 = vld [vmem:[%s561 + $0x90] sm:$0xff]
    %v1651 = vld [vmem:[%s561 + $0x98] sm:$0xff]
    %v1652 = vld [vmem:[%s561 + $0xa0] sm:$0xf]
    %v1653 = vld [vmem:[%s561 + $0xa8] sm:$0xf]
    %v1654 = vld [vmem:[%s561 + $0xb0] sm:$0xf]
    %v1655 = vld [vmem:[%s561 + $0xb8] sm:$0xf]
    %v1656 = vld [vmem:[%s561 + $0xc0] sm:$0xf]
    %v1657 = vmul.f32 %v1097, %v1632
    %v1658 = vmul.f32 %v1098, %v1633
    %v1659 = vmul.f32 %v1099, %v1634
    %v1660 = vmul.f32 %v1100, %v1635
    %v1661 = vmul.f32 %v1101, %v1636
    %v1662 = vmul.f32 %v1102, %v1637
    %v1663 = vmul.f32 %v1103, %v1638
    %v1664 = vmul.f32 %v1104, %v1639
    %v1665 = vmul.f32 %v1105, %v1640
    %v1666 = vmul.f32 %v1106, %v1641
    %v1667 = vmul.f32 %v1107, %v1642
    %v1668 = vmul.f32 %v1108, %v1643
    %v1669 = vmul.f32 %v1109, %v1644
    %v1670 = vmul.f32 %v1110, %v1645
    %v1671 = vmul.f32 %v1111, %v1646
    %v1672 = vmul.f32 %v1112, %v1647
    %v1673 = vmul.f32 %v1113, %v1648
    %v1674 = vmul.f32 %v1114, %v1649
    %v1675 = vmul.f32 %v1115, %v1650
    %v1676 = vmul.f32 %v1116, %v1651
    %v1677 = vmul.f32 %v1117, %v1652
    %v1678 = vmul.f32 %v1118, %v1653
    %v1679 = vmul.f32 %v1119, %v1654
    %v1680 = vmul.f32 %v1120, %v1655
    %v1681 = vmul.f32 %v1121, %v1656
    %v1682 = vadd.f32 %v1657, %v1658
    %v1683 = vadd.f32 %v1682, %v1659
    %v1684 = vadd.f32 %v1683, %v1660
    %v1685 = vsel %vm92, %v1661, 0.0
    %v1686 = vadd.f32 %v1684, %v1685
    %1687 = vadd.xlane.f32.xlu0 %v1686
    %v1688 = vpop.xlane.xlu0 %1687
    %v1689 = vadd.f32 %v1662, %v1663
    %v1690 = vadd.f32 %v1689, %v1664
    %v1691 = vadd.f32 %v1690, %v1665
    %v1692 = vsel %vm92, %v1666, 0.0
    %v1693 = vadd.f32 %v1691, %v1692
    %1694 = vadd.xlane.f32.xlu0 %v1693
    %v1695 = vpop.xlane.xlu0 %1694
    %v1696 = vadd.f32 %v1667, %v1668
    %v1697 = vadd.f32 %v1696, %v1669
    %v1698 = vadd.f32 %v1697, %v1670
    %v1699 = vsel %vm92, %v1671, 0.0
    %v1700 = vadd.f32 %v1698, %v1699
    %1701 = vadd.xlane.f32.xlu0 %v1700
    %v1702 = vpop.xlane.xlu0 %1701
    %v1703 = vadd.f32 %v1672, %v1673
    %v1704 = vadd.f32 %v1703, %v1674
    %v1705 = vadd.f32 %v1704, %v1675
    %v1706 = vsel %vm92, %v1676, 0.0
    %v1707 = vadd.f32 %v1705, %v1706
    %1708 = vadd.xlane.f32.xlu0 %v1707
    %v1709 = vpop.xlane.xlu0 %1708
    %v1710 = vsel %vm118, %v1677, 0.0
    %v1711 = vsel %vm118, %v1678, 0.0
    %v1712 = vadd.f32 %v1710, %v1711
    %v1713 = vsel %vm118, %v1679, 0.0
    %v1714 = vadd.f32 %v1712, %v1713
    %v1715 = vsel %vm118, %v1680, 0.0
    %v1716 = vadd.f32 %v1714, %v1715
    %v1717 = vsel %vm126, %v1681, 0.0
    %v1718 = vadd.f32 %v1716, %v1717
    %1719 = vadd.xlane.f32.xlu0 %v1718
    %v1720 = vpop.xlane.xlu0 %1719
    %v1721 = vadd.f32 %v1688, %v1695
    %v1722 = vadd.f32 %v1721, %v1702
    %v1723 = vadd.f32 %v1722, %v1709
    %v1724 = vsel %vm118, %v1720, 0.0
    %v1725 = vadd.f32 %v1723, %v1724
    %v1726 = vrot.slane %v1725, 4
    %v1727 = vadd.f32 %v1725, %v1726
    %v1728 = vrot.slane %v1727, 2
    %v1729 = vadd.f32 %v1727, %v1728
    %v1730 = vrot.slane %v1729, 1
    %v1731 = vadd.f32 %v1729, %v1730
    %v1732 = vsel %vm662, %v1731, 0.0
    %v1733 = vadd.f32 %v1631, %v1732
    %v1734 = vld [vmem:[%s665] sm:$0xff]
    %v1735 = vld [vmem:[%s665 + $0x8] sm:$0xff]
    %v1736 = vld [vmem:[%s665 + $0x10] sm:$0xff]
    %v1737 = vld [vmem:[%s665 + $0x18] sm:$0xff]
    %v1738 = vld [vmem:[%s665 + $0x20] sm:$0xff]
    %v1739 = vld [vmem:[%s665 + $0x28] sm:$0xff]
    %v1740 = vld [vmem:[%s665 + $0x30] sm:$0xff]
    %v1741 = vld [vmem:[%s665 + $0x38] sm:$0xff]
    %v1742 = vld [vmem:[%s665 + $0x40] sm:$0xff]
    %v1743 = vld [vmem:[%s665 + $0x48] sm:$0xff]
    %v1744 = vld [vmem:[%s665 + $0x50] sm:$0xff]
    %v1745 = vld [vmem:[%s665 + $0x58] sm:$0xff]
    %v1746 = vld [vmem:[%s665 + $0x60] sm:$0xff]
    %v1747 = vld [vmem:[%s665 + $0x68] sm:$0xff]
    %v1748 = vld [vmem:[%s665 + $0x70] sm:$0xff]
    %v1749 = vld [vmem:[%s665 + $0x78] sm:$0xff]
    %v1750 = vld [vmem:[%s665 + $0x80] sm:$0xff]
    %v1751 = vld [vmem:[%s665 + $0x88] sm:$0xff]
    %v1752 = vld [vmem:[%s665 + $0x90] sm:$0xff]
    %v1753 = vld [vmem:[%s665 + $0x98] sm:$0xff]
    %v1754 = vld [vmem:[%s665 + $0xa0] sm:$0xf]
    %v1755 = vld [vmem:[%s665 + $0xa8] sm:$0xf]
    %v1756 = vld [vmem:[%s665 + $0xb0] sm:$0xf]
    %v1757 = vld [vmem:[%s665 + $0xb8] sm:$0xf]
    %v1758 = vld [vmem:[%s665 + $0xc0] sm:$0xf]
    %v1759 = vmul.f32 %v1097, %v1734
    %v1760 = vmul.f32 %v1098, %v1735
    %v1761 = vmul.f32 %v1099, %v1736
    %v1762 = vmul.f32 %v1100, %v1737
    %v1763 = vmul.f32 %v1101, %v1738
    %v1764 = vmul.f32 %v1102, %v1739
    %v1765 = vmul.f32 %v1103, %v1740
    %v1766 = vmul.f32 %v1104, %v1741
    %v1767 = vmul.f32 %v1105, %v1742
    %v1768 = vmul.f32 %v1106, %v1743
    %v1769 = vmul.f32 %v1107, %v1744
    %v1770 = vmul.f32 %v1108, %v1745
    %v1771 = vmul.f32 %v1109, %v1746
    %v1772 = vmul.f32 %v1110, %v1747
    %v1773 = vmul.f32 %v1111, %v1748
    %v1774 = vmul.f32 %v1112, %v1749
    %v1775 = vmul.f32 %v1113, %v1750
    %v1776 = vmul.f32 %v1114, %v1751
    %v1777 = vmul.f32 %v1115, %v1752
    %v1778 = vmul.f32 %v1116, %v1753
    %v1779 = vmul.f32 %v1117, %v1754
    %v1780 = vmul.f32 %v1118, %v1755
    %v1781 = vmul.f32 %v1119, %v1756
    %v1782 = vmul.f32 %v1120, %v1757
    %v1783 = vmul.f32 %v1121, %v1758
    %v1784 = vadd.f32 %v1759, %v1760
    %v1785 = vadd.f32 %v1784, %v1761
    %v1786 = vadd.f32 %v1785, %v1762
    %v1787 = vsel %vm92, %v1763, 0.0
    %v1788 = vadd.f32 %v1786, %v1787
    %1789 = vadd.xlane.f32.xlu0 %v1788
    %v1790 = vpop.xlane.xlu0 %1789
    %v1791 = vadd.f32 %v1764, %v1765
    %v1792 = vadd.f32 %v1791, %v1766
    %v1793 = vadd.f32 %v1792, %v1767
    %v1794 = vsel %vm92, %v1768, 0.0
    %v1795 = vadd.f32 %v1793, %v1794
    %1796 = vadd.xlane.f32.xlu0 %v1795
    %v1797 = vpop.xlane.xlu0 %1796
    %v1798 = vadd.f32 %v1769, %v1770
    %v1799 = vadd.f32 %v1798, %v1771
    %v1800 = vadd.f32 %v1799, %v1772
    %v1801 = vsel %vm92, %v1773, 0.0
    %v1802 = vadd.f32 %v1800, %v1801
    %1803 = vadd.xlane.f32.xlu0 %v1802
    %v1804 = vpop.xlane.xlu0 %1803
    %v1805 = vadd.f32 %v1774, %v1775
    %v1806 = vadd.f32 %v1805, %v1776
    %v1807 = vadd.f32 %v1806, %v1777
    %v1808 = vsel %vm92, %v1778, 0.0
    %v1809 = vadd.f32 %v1807, %v1808
    %1810 = vadd.xlane.f32.xlu0 %v1809
    %v1811 = vpop.xlane.xlu0 %1810
    %v1812 = vsel %vm118, %v1779, 0.0
    %v1813 = vsel %vm118, %v1780, 0.0
    %v1814 = vadd.f32 %v1812, %v1813
    %v1815 = vsel %vm118, %v1781, 0.0
    %v1816 = vadd.f32 %v1814, %v1815
    %v1817 = vsel %vm118, %v1782, 0.0
    %v1818 = vadd.f32 %v1816, %v1817
    %v1819 = vsel %vm126, %v1783, 0.0
    %v1820 = vadd.f32 %v1818, %v1819
    %1821 = vadd.xlane.f32.xlu0 %v1820
    %v1822 = vpop.xlane.xlu0 %1821
    %v1823 = vadd.f32 %v1790, %v1797
    %v1824 = vadd.f32 %v1823, %v1804
    %v1825 = vadd.f32 %v1824, %v1811
    %v1826 = vsel %vm118, %v1822, 0.0
    %v1827 = vadd.f32 %v1825, %v1826
    %v1828 = vrot.slane %v1827, 4
    %v1829 = vadd.f32 %v1827, %v1828
    %v1830 = vrot.slane %v1829, 2
    %v1831 = vadd.f32 %v1829, %v1830
    %v1832 = vrot.slane %v1831, 1
    %v1833 = vadd.f32 %v1831, %v1832
    %v1834 = vsel %vm766, %v1833, 0.0
    %v1835 = vadd.f32 %v1733, %v1834
    %v1836 = vld [vmem:[%s769] sm:$0xff]
    %v1837 = vld [vmem:[%s769 + $0x8] sm:$0xff]
    %v1838 = vld [vmem:[%s769 + $0x10] sm:$0xff]
    %v1839 = vld [vmem:[%s769 + $0x18] sm:$0xff]
    %v1840 = vld [vmem:[%s769 + $0x20] sm:$0xff]
    %v1841 = vld [vmem:[%s769 + $0x28] sm:$0xff]
    %v1842 = vld [vmem:[%s769 + $0x30] sm:$0xff]
    %v1843 = vld [vmem:[%s769 + $0x38] sm:$0xff]
    %v1844 = vld [vmem:[%s769 + $0x40] sm:$0xff]
    %v1845 = vld [vmem:[%s769 + $0x48] sm:$0xff]
    %v1846 = vld [vmem:[%s769 + $0x50] sm:$0xff]
    %v1847 = vld [vmem:[%s769 + $0x58] sm:$0xff]
    %v1848 = vld [vmem:[%s769 + $0x60] sm:$0xff]
    %v1849 = vld [vmem:[%s769 + $0x68] sm:$0xff]
    %v1850 = vld [vmem:[%s769 + $0x70] sm:$0xff]
    %v1851 = vld [vmem:[%s769 + $0x78] sm:$0xff]
    %v1852 = vld [vmem:[%s769 + $0x80] sm:$0xff]
    %v1853 = vld [vmem:[%s769 + $0x88] sm:$0xff]
    %v1854 = vld [vmem:[%s769 + $0x90] sm:$0xff]
    %v1855 = vld [vmem:[%s769 + $0x98] sm:$0xff]
    %v1856 = vld [vmem:[%s769 + $0xa0] sm:$0xf]
    %v1857 = vld [vmem:[%s769 + $0xa8] sm:$0xf]
    %v1858 = vld [vmem:[%s769 + $0xb0] sm:$0xf]
    %v1859 = vld [vmem:[%s769 + $0xb8] sm:$0xf]
    %v1860 = vld [vmem:[%s769 + $0xc0] sm:$0xf]
    %v1861 = vmul.f32 %v1097, %v1836
    %v1862 = vmul.f32 %v1098, %v1837
    %v1863 = vmul.f32 %v1099, %v1838
    %v1864 = vmul.f32 %v1100, %v1839
    %v1865 = vmul.f32 %v1101, %v1840
    %v1866 = vmul.f32 %v1102, %v1841
    %v1867 = vmul.f32 %v1103, %v1842
    %v1868 = vmul.f32 %v1104, %v1843
    %v1869 = vmul.f32 %v1105, %v1844
    %v1870 = vmul.f32 %v1106, %v1845
    %v1871 = vmul.f32 %v1107, %v1846
    %v1872 = vmul.f32 %v1108, %v1847
    %v1873 = vmul.f32 %v1109, %v1848
    %v1874 = vmul.f32 %v1110, %v1849
    %v1875 = vmul.f32 %v1111, %v1850
    %v1876 = vmul.f32 %v1112, %v1851
    %v1877 = vmul.f32 %v1113, %v1852
    %v1878 = vmul.f32 %v1114, %v1853
    %v1879 = vmul.f32 %v1115, %v1854
    %v1880 = vmul.f32 %v1116, %v1855
    %v1881 = vmul.f32 %v1117, %v1856
    %v1882 = vmul.f32 %v1118, %v1857
    %v1883 = vmul.f32 %v1119, %v1858
    %v1884 = vmul.f32 %v1120, %v1859
    %v1885 = vmul.f32 %v1121, %v1860
    %v1886 = vadd.f32 %v1861, %v1862
    %v1887 = vadd.f32 %v1886, %v1863
    %v1888 = vadd.f32 %v1887, %v1864
    %v1889 = vsel %vm92, %v1865, 0.0
    %v1890 = vadd.f32 %v1888, %v1889
    %1891 = vadd.xlane.f32.xlu0 %v1890
    %v1892 = vpop.xlane.xlu0 %1891
    %v1893 = vadd.f32 %v1866, %v1867
    %v1894 = vadd.f32 %v1893, %v1868
    %v1895 = vadd.f32 %v1894, %v1869
    %v1896 = vsel %vm92, %v1870, 0.0
    %v1897 = vadd.f32 %v1895, %v1896
    %1898 = vadd.xlane.f32.xlu0 %v1897
    %v1899 = vpop.xlane.xlu0 %1898
    %v1900 = vadd.f32 %v1871, %v1872
    %v1901 = vadd.f32 %v1900, %v1873
    %v1902 = vadd.f32 %v1901, %v1874
    %v1903 = vsel %vm92, %v1875, 0.0
    %v1904 = vadd.f32 %v1902, %v1903
    %1905 = vadd.xlane.f32.xlu0 %v1904
    %v1906 = vpop.xlane.xlu0 %1905
    %v1907 = vadd.f32 %v1876, %v1877
    %v1908 = vadd.f32 %v1907, %v1878
    %v1909 = vadd.f32 %v1908, %v1879
    %v1910 = vsel %vm92, %v1880, 0.0
    %v1911 = vadd.f32 %v1909, %v1910
    %1912 = vadd.xlane.f32.xlu0 %v1911
    %v1913 = vpop.xlane.xlu0 %1912
    %v1914 = vsel %vm118, %v1881, 0.0
    %v1915 = vsel %vm118, %v1882, 0.0
    %v1916 = vadd.f32 %v1914, %v1915
    %v1917 = vsel %vm118, %v1883, 0.0
    %v1918 = vadd.f32 %v1916, %v1917
    %v1919 = vsel %vm118, %v1884, 0.0
    %v1920 = vadd.f32 %v1918, %v1919
    %v1921 = vsel %vm126, %v1885, 0.0
    %v1922 = vadd.f32 %v1920, %v1921
    %1923 = vadd.xlane.f32.xlu0 %v1922
    %v1924 = vpop.xlane.xlu0 %1923
    %v1925 = vadd.f32 %v1892, %v1899
    %v1926 = vadd.f32 %v1925, %v1906
    %v1927 = vadd.f32 %v1926, %v1913
    %v1928 = vsel %vm118, %v1924, 0.0
    %v1929 = vadd.f32 %v1927, %v1928
    %v1930 = vrot.slane %v1929, 4
    %v1931 = vadd.f32 %v1929, %v1930
    %v1932 = vrot.slane %v1931, 2
    %v1933 = vadd.f32 %v1931, %v1932
    %v1934 = vrot.slane %v1933, 1
    %v1935 = vadd.f32 %v1933, %v1934
    %v1936 = vsel %vm870, %v1935, 0.0
    %v1937 = vadd.f32 %v1835, %v1936
    %v1938 = vld [vmem:[%s873] sm:$0xff]
    %v1939 = vld [vmem:[%s873 + $0x8] sm:$0xff]
    %v1940 = vld [vmem:[%s873 + $0x10] sm:$0xff]
    %v1941 = vld [vmem:[%s873 + $0x18] sm:$0xff]
    %v1942 = vld [vmem:[%s873 + $0x20] sm:$0xff]
    %v1943 = vld [vmem:[%s873 + $0x28] sm:$0xff]
    %v1944 = vld [vmem:[%s873 + $0x30] sm:$0xff]
    %v1945 = vld [vmem:[%s873 + $0x38] sm:$0xff]
    %v1946 = vld [vmem:[%s873 + $0x40] sm:$0xff]
    %v1947 = vld [vmem:[%s873 + $0x48] sm:$0xff]
    %v1948 = vld [vmem:[%s873 + $0x50] sm:$0xff]
    %v1949 = vld [vmem:[%s873 + $0x58] sm:$0xff]
    %v1950 = vld [vmem:[%s873 + $0x60] sm:$0xff]
    %v1951 = vld [vmem:[%s873 + $0x68] sm:$0xff]
    %v1952 = vld [vmem:[%s873 + $0x70] sm:$0xff]
    %v1953 = vld [vmem:[%s873 + $0x78] sm:$0xff]
    %v1954 = vld [vmem:[%s873 + $0x80] sm:$0xff]
    %v1955 = vld [vmem:[%s873 + $0x88] sm:$0xff]
    %v1956 = vld [vmem:[%s873 + $0x90] sm:$0xff]
    %v1957 = vld [vmem:[%s873 + $0x98] sm:$0xff]
    %v1958 = vld [vmem:[%s873 + $0xa0] sm:$0xf]
    %v1959 = vld [vmem:[%s873 + $0xa8] sm:$0xf]
    %v1960 = vld [vmem:[%s873 + $0xb0] sm:$0xf]
    %v1961 = vld [vmem:[%s873 + $0xb8] sm:$0xf]
    %v1962 = vld [vmem:[%s873 + $0xc0] sm:$0xf]
    %v1963 = vmul.f32 %v1097, %v1938
    %v1964 = vmul.f32 %v1098, %v1939
    %v1965 = vmul.f32 %v1099, %v1940
    %v1966 = vmul.f32 %v1100, %v1941
    %v1967 = vmul.f32 %v1101, %v1942
    %v1968 = vmul.f32 %v1102, %v1943
    %v1969 = vmul.f32 %v1103, %v1944
    %v1970 = vmul.f32 %v1104, %v1945
    %v1971 = vmul.f32 %v1105, %v1946
    %v1972 = vmul.f32 %v1106, %v1947
    %v1973 = vmul.f32 %v1107, %v1948
    %v1974 = vmul.f32 %v1108, %v1949
    %v1975 = vmul.f32 %v1109, %v1950
    %v1976 = vmul.f32 %v1110, %v1951
    %v1977 = vmul.f32 %v1111, %v1952
    %v1978 = vmul.f32 %v1112, %v1953
    %v1979 = vmul.f32 %v1113, %v1954
    %v1980 = vmul.f32 %v1114, %v1955
    %v1981 = vmul.f32 %v1115, %v1956
    %v1982 = vmul.f32 %v1116, %v1957
    %v1983 = vmul.f32 %v1117, %v1958
    %v1984 = vmul.f32 %v1118, %v1959
    %v1985 = vmul.f32 %v1119, %v1960
    %v1986 = vmul.f32 %v1120, %v1961
    %v1987 = vmul.f32 %v1121, %v1962
    %v1988 = vadd.f32 %v1963, %v1964
    %v1989 = vadd.f32 %v1988, %v1965
    %v1990 = vadd.f32 %v1989, %v1966
    %v1991 = vsel %vm92, %v1967, 0.0
    %v1992 = vadd.f32 %v1990, %v1991
    %1993 = vadd.xlane.f32.xlu0 %v1992
    %v1994 = vpop.xlane.xlu0 %1993
    %v1995 = vadd.f32 %v1968, %v1969
    %v1996 = vadd.f32 %v1995, %v1970
    %v1997 = vadd.f32 %v1996, %v1971
    %v1998 = vsel %vm92, %v1972, 0.0
    %v1999 = vadd.f32 %v1997, %v1998
    %2000 = vadd.xlane.f32.xlu0 %v1999
    %v2001 = vpop.xlane.xlu0 %2000
    %v2002 = vadd.f32 %v1973, %v1974
    %v2003 = vadd.f32 %v2002, %v1975
    %v2004 = vadd.f32 %v2003, %v1976
    %v2005 = vsel %vm92, %v1977, 0.0
    %v2006 = vadd.f32 %v2004, %v2005
    %2007 = vadd.xlane.f32.xlu0 %v2006
    %v2008 = vpop.xlane.xlu0 %2007
    %v2009 = vadd.f32 %v1978, %v1979
    %v2010 = vadd.f32 %v2009, %v1980
    %v2011 = vadd.f32 %v2010, %v1981
    %v2012 = vsel %vm92, %v1982, 0.0
    %v2013 = vadd.f32 %v2011, %v2012
    %2014 = vadd.xlane.f32.xlu0 %v2013
    %v2015 = vpop.xlane.xlu0 %2014
    %v2016 = vsel %vm118, %v1983, 0.0
    %v2017 = vsel %vm118, %v1984, 0.0
    %v2018 = vadd.f32 %v2016, %v2017
    %v2019 = vsel %vm118, %v1985, 0.0
    %v2020 = vadd.f32 %v2018, %v2019
    %v2021 = vsel %vm118, %v1986, 0.0
    %v2022 = vadd.f32 %v2020, %v2021
    %v2023 = vsel %vm126, %v1987, 0.0
    %v2024 = vadd.f32 %v2022, %v2023
    %2025 = vadd.xlane.f32.xlu0 %v2024
    %v2026 = vpop.xlane.xlu0 %2025
    %v2027 = vadd.f32 %v1994, %v2001
    %v2028 = vadd.f32 %v2027, %v2008
    %v2029 = vadd.f32 %v2028, %v2015
    %v2030 = vsel %vm118, %v2026, 0.0
    %v2031 = vadd.f32 %v2029, %v2030
    %v2032 = vrot.slane %v2031, 4
    %v2033 = vadd.f32 %v2031, %v2032
    %v2034 = vrot.slane %v2033, 2
    %v2035 = vadd.f32 %v2033, %v2034
    %v2036 = vrot.slane %v2035, 1
    %v2037 = vadd.f32 %v2035, %v2036
    %v2038 = vsel %vm974, %v2037, 0.0
    %v2039 = vadd.f32 %v1937, %v2038
    %v2040 = vld [vmem:[%s977] sm:$0xff]
    %v2041 = vld [vmem:[%s977 + $0x8] sm:$0xff]
    %v2042 = vld [vmem:[%s977 + $0x10] sm:$0xff]
    %v2043 = vld [vmem:[%s977 + $0x18] sm:$0xff]
    %v2044 = vld [vmem:[%s977 + $0x20] sm:$0xff]
    %v2045 = vld [vmem:[%s977 + $0x28] sm:$0xff]
    %v2046 = vld [vmem:[%s977 + $0x30] sm:$0xff]
    %v2047 = vld [vmem:[%s977 + $0x38] sm:$0xff]
    %v2048 = vld [vmem:[%s977 + $0x40] sm:$0xff]
    %v2049 = vld [vmem:[%s977 + $0x48] sm:$0xff]
    %v2050 = vld [vmem:[%s977 + $0x50] sm:$0xff]
    %v2051 = vld [vmem:[%s977 + $0x58] sm:$0xff]
    %v2052 = vld [vmem:[%s977 + $0x60] sm:$0xff]
    %v2053 = vld [vmem:[%s977 + $0x68] sm:$0xff]
    %v2054 = vld [vmem:[%s977 + $0x70] sm:$0xff]
    %v2055 = vld [vmem:[%s977 + $0x78] sm:$0xff]
    %v2056 = vld [vmem:[%s977 + $0x80] sm:$0xff]
    %v2057 = vld [vmem:[%s977 + $0x88] sm:$0xff]
    %v2058 = vld [vmem:[%s977 + $0x90] sm:$0xff]
    %v2059 = vld [vmem:[%s977 + $0x98] sm:$0xff]
    %v2060 = vld [vmem:[%s977 + $0xa0] sm:$0xf]
    %v2061 = vld [vmem:[%s977 + $0xa8] sm:$0xf]
    %v2062 = vld [vmem:[%s977 + $0xb0] sm:$0xf]
    %v2063 = vld [vmem:[%s977 + $0xb8] sm:$0xf]
    %v2064 = vld [vmem:[%s977 + $0xc0] sm:$0xf]
    %v2065 = vmul.f32 %v1097, %v2040
    %v2066 = vmul.f32 %v1098, %v2041
    %v2067 = vmul.f32 %v1099, %v2042
    %v2068 = vmul.f32 %v1100, %v2043
    %v2069 = vmul.f32 %v1101, %v2044
    %v2070 = vmul.f32 %v1102, %v2045
    %v2071 = vmul.f32 %v1103, %v2046
    %v2072 = vmul.f32 %v1104, %v2047
    %v2073 = vmul.f32 %v1105, %v2048
    %v2074 = vmul.f32 %v1106, %v2049
    %v2075 = vmul.f32 %v1107, %v2050
    %v2076 = vmul.f32 %v1108, %v2051
    %v2077 = vmul.f32 %v1109, %v2052
    %v2078 = vmul.f32 %v1110, %v2053
    %v2079 = vmul.f32 %v1111, %v2054
    %v2080 = vmul.f32 %v1112, %v2055
    %v2081 = vmul.f32 %v1113, %v2056
    %v2082 = vmul.f32 %v1114, %v2057
    %v2083 = vmul.f32 %v1115, %v2058
    %v2084 = vmul.f32 %v1116, %v2059
    %v2085 = vmul.f32 %v1117, %v2060
    %v2086 = vmul.f32 %v1118, %v2061
    %v2087 = vmul.f32 %v1119, %v2062
    %v2088 = vmul.f32 %v1120, %v2063
    %v2089 = vmul.f32 %v1121, %v2064
    %v2090 = vadd.f32 %v2065, %v2066
    %v2091 = vadd.f32 %v2090, %v2067
    %v2092 = vadd.f32 %v2091, %v2068
    %v2093 = vsel %vm92, %v2069, 0.0
    %v2094 = vadd.f32 %v2092, %v2093
    %2095 = vadd.xlane.f32.xlu0 %v2094
    %v2096 = vpop.xlane.xlu0 %2095
    %v2097 = vadd.f32 %v2070, %v2071
    %v2098 = vadd.f32 %v2097, %v2072
    %v2099 = vadd.f32 %v2098, %v2073
    %v2100 = vsel %vm92, %v2074, 0.0
    %v2101 = vadd.f32 %v2099, %v2100
    %2102 = vadd.xlane.f32.xlu0 %v2101
    %v2103 = vpop.xlane.xlu0 %2102
    %v2104 = vadd.f32 %v2075, %v2076
    %v2105 = vadd.f32 %v2104, %v2077
    %v2106 = vadd.f32 %v2105, %v2078
    %v2107 = vsel %vm92, %v2079, 0.0
    %v2108 = vadd.f32 %v2106, %v2107
    %2109 = vadd.xlane.f32.xlu0 %v2108
    %v2110 = vpop.xlane.xlu0 %2109
    %v2111 = vadd.f32 %v2080, %v2081
    %v2112 = vadd.f32 %v2111, %v2082
    %v2113 = vadd.f32 %v2112, %v2083
    %v2114 = vsel %vm92, %v2084, 0.0
    %v2115 = vadd.f32 %v2113, %v2114
    %2116 = vadd.xlane.f32.xlu0 %v2115
    %v2117 = vpop.xlane.xlu0 %2116
    %v2118 = vsel %vm118, %v2085, 0.0
    %v2119 = vsel %vm118, %v2086, 0.0
    %v2120 = vadd.f32 %v2118, %v2119
    %v2121 = vsel %vm118, %v2087, 0.0
    %v2122 = vadd.f32 %v2120, %v2121
    %v2123 = vsel %vm118, %v2088, 0.0
    %v2124 = vadd.f32 %v2122, %v2123
    %v2125 = vsel %vm126, %v2089, 0.0
    %v2126 = vadd.f32 %v2124, %v2125
    %2127 = vadd.xlane.f32.xlu0 %v2126
    %v2128 = vpop.xlane.xlu0 %2127
    %v2129 = vadd.f32 %v2096, %v2103
    %v2130 = vadd.f32 %v2129, %v2110
    %v2131 = vadd.f32 %v2130, %v2117
    %v2132 = vsel %vm118, %v2128, 0.0
    %v2133 = vadd.f32 %v2131, %v2132
    %v2134 = vrot.slane %v2133, 4
    %v2135 = vadd.f32 %v2133, %v2134
    %v2136 = vrot.slane %v2135, 2
    %v2137 = vadd.f32 %v2135, %v2136
    %v2138 = vrot.slane %v2137, 1
    %v2139 = vadd.f32 %v2137, %v2138
    %v2140 = vsel %vm1078, %v2139, 0.0
    %v2141 = vadd.f32 %v2039, %v2140
    %v2142 = vsel %vm1081, %v2141, -inf
    %2143 = vmax.xlane.f32.xlu0 %v2142
    %v2144 = vpop.xlane.xlu0 %2143
    %v2145 = vsub.f32 %v2141, %v2144
    %v2146 = vmul.f32 %v2145, 1.442695
    %v2147 = vpow.pop %v2146
    %v2148 = vsel %vm1081, %v2147, 0.0
    %2149 = vadd.xlane.f32.xlu0 %v2148
    %v2150 = vpop.xlane.xlu0 %2149
    %v2151 = vlog2.pop %v2150
    %v2152 = vmul.f32 %v2151, 0.6931472
    %v2153 = vsub.f32 %v2145, %v2152
    %2154 = vst.msk [vmem:[#allocation2 + $0x1] sm:$0x1] %vm1094, %v2153
    // Predicated region
    $region10: #{conv2d_then_linear.1} parent=1 // pred_check
      _
    $region11: #{conv2d_then_linear.1} parent=1 // pred_check_branch
      %2156 = sbr.rel (0) target = $region13
    $region12: #{conv2d_then_linear.1} parent=1 // pred_region
      %s2158 = ssub.s32 32, 32
      %2159 = vsyncadd [#allocation3], %s2158
      %s2161 = sshll.u32 [#allocation2], 4
      %s2162 = int_to_ptr.vmem [resolvable:$true] %s2161
      %2164 = dma.vmem_to_hbm [thread:$0]  %s2162, 32, %s2, [#allocation3]
    $region13: #{conv2d_then_linear.1} parent=1 // pred_fallthru
      _
    // Predicated region
    $region14: #{conv2d_then_linear.1} parent=1 // pred_check
      _
    $region15: #{conv2d_then_linear.1} parent=1 // pred_check_branch
      %2166 = sbr.rel (0) target = $region17
    $region16: #{conv2d_then_linear.1} parent=1 // pred_region
      %2167 = dma.done [#allocation3], 32
    $region17: #{conv2d_then_linear.1} parent=1 // pred_fallthru
      _
    %2168 = vsyncpa [#allocation3], 1

</llo_original>
